<compile_context>
chip_gen: v5e
topology: v5e:2x2
jax: 0.10.0
libtpu: 0.0.40
codegen_flags: <defaults>
</compile_context>

<pallas_src>
import functools

import jax
import jax.numpy as jnp
from jax import lax
from jax.experimental import pallas as pl
from jax.experimental.pallas import tpu as pltpu

_BN_EPS = 1e-5  # nn.BatchNorm2d default


def _vmem_limit_bytes():
  """Generation-aware scoped-VMEM limit (~3/4 of per-core VMEM, clamped)."""
  try:
    cap = int(pltpu.get_tpu_info().vmem_capacity_bytes)
  except Exception:
    cap = 64 * 1024 * 1024            # conservative (v7x-safe) fallback
  return int(min(96 * 1024 * 1024, max(32 * 1024 * 1024, cap * 3 // 4)))


def _pick_row_tile(ho, wo):
  """Output-row tile TOH: divisor of HO, (TOH*WO) % 8 == 0, ~128 rows/tile."""
  cands = [d for d in range(1, ho + 1) if ho % d == 0 and (d * wo) % 8 == 0]
  small = [d for d in cands if d * wo <= 128]
  if small:
    return max(small)
  if cands:
    return min(cands)
  return ho


def _conv_rows(xw_ref, w_ref, t, *, toh, wo, kh, kcw, stride):
  """Conv for output rows [t*toh, (t+1)*toh): list of (row_off, (rows, Cpad) f32).

  xw_ref rows are valid output positions only (the wrapper's width-unfold
  already applied the column stride), so no mask / crop is ever needed.
  """
  if stride == 1:
    base = t * toh
    acc = None
    for i in range(kh):              # kh-length accumulation chain, K = kw*cin
      start = (base + i) * wo
      if wo % 8 == 0:
        start = pl.multiple_of(start, 8)
      lhs = xw_ref[pl.ds(start, toh * wo), :]
      rhs = w_ref[pl.ds(i * kcw, kcw), :]
      d = jnp.dot(lhs, rhs, preferred_element_type=jnp.float32)
      acc = d if acc is None else acc + d
    return [(0, acc)]
  # stride > 1: only the valid output rows are computed (no stride^2 waste).
  pieces = []
  for r in range(toh):
    acc = None
    for i in range(kh):
      start = ((t * toh + r) * stride + i) * wo
      lhs = xw_ref[pl.ds(start, wo), :]
      rhs = w_ref[pl.ds(i * kcw, kcw), :]
      d = jnp.dot(lhs, rhs, preferred_element_type=jnp.float32)
      acc = d if acc is None else acc + d
    pieces.append((r * wo, acc))
  return pieces


def _stats_kernel(xw_ref, w_ref, stat_ref, *, toh, wo, kh, kcw, stride):
  """Pass 1: packed per-(image, row-tile) BN partials [sum ; sum_of_squares]."""
  t = pl.program_id(1)
  ssum = None
  ssq = None
  for _, y in _conv_rows(xw_ref, w_ref, t, toh=toh, wo=wo, kh=kh, kcw=kcw,
                         stride=stride):
    s1 = jnp.sum(y, axis=0, keepdims=True)
    s2 = jnp.sum(y * y, axis=0, keepdims=True)
    ssum = s1 if ssum is None else ssum + s1
    ssq = s2 if ssq is None else ssq + s2
  stat_ref[pl.ds(0, 1), :] = ssum
  stat_ref[pl.ds(1, 1), :] = ssq


def _out_kernel(xw_ref, w_ref, scale_ref, shift_ref, o_ref, *, toh, wo, kh,
                kcw, stride, cout):
  """Pass 2: recompute conv (no y round trip), folded BN FMA + ReLU, store."""
  t = pl.program_id(1)
  scale = scale_ref[...]
  shift = shift_ref[...]
  for off, y in _conv_rows(xw_ref, w_ref, t, toh=toh, wo=wo, kh=kh, kcw=kcw,
                           stride=stride):
    z = jnp.maximum(y * scale + shift, 0.0)
    o_ref[pl.ds(off, z.shape[0]), :] = z[:, :cout]


@functools.partial(jax.jit, static_argnames=("stride", "upsample"))
def conv_block_forward(x_nchw, weight, bias, gamma, beta, *, stride=1,
                       upsample=False):
  """Pallas ConvBlock forward.  x_nchw: (N, Cin, H, W) float32.

  `bias` is accepted for API parity with nn.Conv2d but intentionally unused:
  under training-mode BatchNorm the per-channel constant is cancelled exactly
  by the mean subtraction.  (Must be restored if reused with eval-mode
  running stats.)
  """
  del bias
  cout, cin, kh, kw = weight.shape
  pad = kh // 2
  n = x_nchw.shape[0]

  x = jnp.transpose(x_nchw, (0, 2, 3, 1)).astype(jnp.float32)   # NCHW -> NHWC
  if upsample:
    # Nearest, scale_factor=2 (wrapper glue; see TODO at top of file).
    x = jnp.repeat(jnp.repeat(x, 2, axis=1), 2, axis=2)
  _, hin, win, _ = x.shape

  ho = (hin + 2 * pad - kh) // stride + 1
  wo = (win + 2 * pad - kw) // stride + 1
  hpad = hin + 2 * pad
  kcw = kw * cin
  cpad = ((cout + 127) // 128) * 128        # lane-dense matmul RHS / result
  toh = _pick_row_tile(ho, wo)
  n_t = ho // toh

  # ---- wrapper-side layout glue (tiny, plain XLA) ----
  # Width-unfold at the *strided* column anchors:
  #   xw[b, h, ow, j*cin + c] = x_pad[b, h, ow*stride + j, c]
  # Every kernel matmul row is a real output position (no mask, no crop,
  # K = kw*cin, lane dim kw*cin).  Costs ~kw x on the smallest HBM stream
  # (the input) -- far below the padded-y / padded-output traffic it removes.
  xp = jnp.pad(x, ((0, 0), (pad, pad), (pad, pad), (0, 0)))
  cols = [xp[:, :, j:j + (wo - 1) * stride + 1:stride, :] for j in range(kw)]
  xw = jnp.concatenate(cols, axis=-1)                    # (n, hpad, wo, kcw)
  xwf = xw.reshape(n, hpad * wo, kcw).astype(jnp.bfloat16)

  # PyTorch weight (Cout, Cin, KH, KW) -> rows ordered (i, j, c), cols Cpad.
  w2d = jnp.transpose(weight, (2, 3, 1, 0)).reshape(kh * kcw, cout)
  w2d = jnp.pad(w2d, ((0, 0), (0, cpad - cout))).astype(jnp.bfloat16)

  cparams = pltpu.CompilerParams(
      dimension_semantics=("parallel", "parallel"),
      vmem_limit_bytes=_vmem_limit_bytes())

  xw_spec = pl.BlockSpec((None, hpad * wo, kcw), lambda b, t: (b, 0, 0))
  w_spec = pl.BlockSpec((kh * kcw, cpad), lambda b, t: (0, 0))

  flops = 2 * n * ho * wo * kh * kcw * cpad

  # ---------------- pass 1: conv -> packed BN partials ----------------
  stats = pl.pallas_call(
      functools.partial(_stats_kernel, toh=toh, wo=wo, kh=kh, kcw=kcw,
                        stride=stride),
      grid=(n, n_t),
      in_specs=[xw_spec, w_spec],
      out_specs=pl.BlockSpec((None, None, 2, cpad), lambda b, t: (b, t, 0, 0)),
      out_shape=jax.ShapeDtypeStruct((n, n_t, 2, cpad), jnp.float32),
      compiler_params=cparams,
      cost_estimate=pl.CostEstimate(
          flops=flops, transcendentals=0,
          bytes_accessed=(n * hpad * wo * kcw * 2 + kh * kcw * cpad * 2
                          + n * n_t * 2 * cpad * 4)),
  )(xwf, w2d)

  # ---- glue: combine partials -> folded BN affine (scale, shift) ----
  count = jnp.float32(n * ho * wo)
  mean = jnp.sum(stats[:, :, 0, :], axis=(0, 1)) / count           # (cpad,)
  ex2 = jnp.sum(stats[:, :, 1, :], axis=(0, 1)) / count
  # E[x^2]-E[x]^2 can cancel when |mean| >> std; clamp keeps rsqrt finite.
  # TODO(synk): shifted / Welford-style combination for extreme channel means.
  var = jnp.maximum(ex2 - mean * mean, 0.0)
  gpad = jnp.pad(gamma.astype(jnp.float32), (0, cpad - cout))
  bpad = jnp.pad(beta.astype(jnp.float32), (0, cpad - cout))
  scale_v = gpad * lax.rsqrt(var + _BN_EPS)
  scale = scale_v.reshape(1, cpad)
  shift = (bpad - mean * scale_v).reshape(1, cpad)

  # -------- pass 2: recompute conv, BN FMA + ReLU, compact output --------
  out_flat = pl.pallas_call(
      functools.partial(_out_kernel, toh=toh, wo=wo, kh=kh, kcw=kcw,
                        stride=stride, cout=cout),
      grid=(n, n_t),
      in_specs=[xw_spec, w_spec,
                pl.BlockSpec((1, cpad), lambda b, t: (0, 0)),
                pl.BlockSpec((1, cpad), lambda b, t: (0, 0))],
      out_specs=pl.BlockSpec((None, toh * wo, cout), lambda b, t: (b, t, 0)),
      out_shape=jax.ShapeDtypeStruct((n, ho * wo, cout), jnp.float32),
      compiler_params=cparams,
      cost_estimate=pl.CostEstimate(
          flops=flops + 3 * n * ho * wo * cpad, transcendentals=0,
          bytes_accessed=(n * hpad * wo * kcw * 2 + kh * kcw * cpad * 2
                          + 2 * cpad * 4 + n * ho * wo * cout * 4)),
  )(xwf, w2d, scale, shift)

  # Layout fix-up on the already-compact result (one small fused XLA op).
  # TODO(synk): emit NCHW directly once an in-kernel (positions, Cout) lane
  #             transpose is wired up.
  out = out_flat.reshape(n, ho, wo, cout)
  return jnp.transpose(out, (0, 3, 1, 2))                          # -> NCHW


def _reference(x_nchw, weight, bias, gamma, beta, *, stride=1, upsample=False):
  """Pure-JAX f32 reference matching PyTorch ConvBlock.forward (training BN)."""
  x = x_nchw.astype(jnp.float32)
  if upsample:
    x = jnp.repeat(jnp.repeat(x, 2, axis=2), 2, axis=3)
  pad = weight.shape[2] // 2
  y = lax.conv_general_dilated(
      x, weight.astype(jnp.float32), (stride, stride),
      [(pad, pad), (pad, pad)],
      dimension_numbers=("NCHW", "OIHW", "NCHW"))
  y = y + bias.reshape(1, -1, 1, 1)
  mean = jnp.mean(y, axis=(0, 2, 3), keepdims=True)
  var = jnp.mean((y - mean) ** 2, axis=(0, 2, 3), keepdims=True)
  y = (y - mean) * lax.rsqrt(var + _BN_EPS)
  y = y * gamma.reshape(1, -1, 1, 1) + beta.reshape(1, -1, 1, 1)
  return jnp.maximum(y, 0.0)


def _init_params(key, in_channels, out_channels, kernel_size):
  """PyTorch-like init (uniform +/- 1/sqrt(fan_in); BN gamma=1, beta=0)."""
  kw_, kb_ = jax.random.split(key)
  fan_in = in_channels * kernel_size * kernel_size
  bound = 1.0 / jnp.sqrt(float(fan_in))
  weight = jax.random.uniform(
      kw_, (out_channels, in_channels, kernel_size, kernel_size),
      minval=-bound, maxval=bound, dtype=jnp.float32)
  bias = jax.random.uniform(
      kb_, (out_channels,), minval=-bound, maxval=bound, dtype=jnp.float32)
  gamma = jnp.ones((out_channels,), jnp.float32)
  beta = jnp.zeros((out_channels,), jnp.float32)
  return weight, bias, gamma, beta


if __name__ == "__main__":
  key = jax.random.PRNGKey(0)
  k_x1, k_x2, k_p1, k_p2 = jax.random.split(key, 4)

  # Tolerance sized for bf16 MXU inputs vs. an f32 reference (post-BN outputs
  # are O(1), so 5e-2 comfortably bounds bf16 rounding error).
  ATOL = RTOL = 5e-2

  # Config 1: ConvBlock(4 -> 8, k=3, stride=1, upsample=False)
  x1 = jax.random.normal(k_x1, (2, 4, 16, 16), dtype=jnp.float32)
  w1, b1, g1, be1 = _init_params(k_p1, 4, 8, 3)
  out1 = conv_block_forward(x1, w1, b1, g1, be1, stride=1, upsample=False)
  out1 = jax.block_until_ready(out1)
  ref1 = _reference(x1, w1, b1, g1, be1, stride=1, upsample=False)
  assert out1.shape == (2, 8, 16, 16)
  assert jnp.allclose(out1, ref1, atol=ATOL, rtol=RTOL)

  # Config 2: ConvBlock(4 -> 8, k=3, stride=1, upsample=True)
  x2 = jax.random.normal(k_x2, (2, 4, 8, 8), dtype=jnp.float32)
  w2, b2, g2, be2 = _init_params(k_p2, 4, 8, 3)
  out2 = conv_block_forward(x2, w2, b2, g2, be2, stride=1, upsample=True)
  out2 = jax.block_until_ready(out2)
  ref2 = _reference(x2, w2, b2, g2, be2, stride=1, upsample=True)
  assert out2.shape == (2, 8, 16, 16)
  assert jnp.allclose(out2, ref2, atol=ATOL, rtol=RTOL)

  print("KERNEL_OK")
</pallas_src>

<mosaic_0001>
module attributes {stable_mosaic.version = 11 : i64} {
  func.func @_stats_kernel(%arg0: i32, %arg1: i32, %arg2: memref<1x288x12xbf16, #tpu.memory_space<vmem>>, %arg3: memref<36x128xbf16, #tpu.memory_space<vmem>>, %arg4: memref<1x1x2x128xf32, #tpu.memory_space<vmem>>) attributes {dimension_semantics = [#tpu.dimension_semantics<parallel>, #tpu.dimension_semantics<parallel>], iteration_bounds = array<i64: 2, 2>, scalar_prefetch = 0 : i64, scratch_operands = 0 : i64, tpu.core_type = #tpu.core_type<tc>, window_params = [{transform_indices = @transform_0, window_bounds = array<i64: 1, 288, 12>}, {pipeline_mode = #tpu.pipeline_mode<synchronous>, transform_indices = @transform_1, window_bounds = array<i64: 36, 128>}, {transform_indices = @transform_2, window_bounds = array<i64: 1, 1, 2, 128>}]} {
    %c8_i32 = arith.constant 8 : i32
    %0 = arith.muli %arg1, %c8_i32 : i32
    %c0_i32 = arith.constant 0 : i32
    %1 = arith.addi %0, %c0_i32 : i32
    %c16_i32 = arith.constant 16 : i32
    %2 = arith.muli %1, %c16_i32 : i32
    %3 = tpu.assume_multiple %2, 8 : i32
    %c0 = arith.constant 0 : index
    %4 = arith.index_cast %3 : i32 to index
    %c0_0 = arith.constant 0 : index
    %5 = vector.load %arg2[%c0, %4, %c0_0] : memref<1x288x12xbf16, #tpu.memory_space<vmem>>, vector<1x128x12xbf16>
    %6 = vector.shape_cast %5 : vector<1x128x12xbf16> to vector<128x12xbf16>
    %c0_1 = arith.constant 0 : index
    %c0_2 = arith.constant 0 : index
    %7 = vector.load %arg3[%c0_1, %c0_2] : memref<36x128xbf16, #tpu.memory_space<vmem>>, vector<12x128xbf16>
    %cst = arith.constant dense<0.000000e+00> : vector<128x128xf32>
    %8 = tpu.matmul %6, %7, %cst {dimension_numbers = #tpu.dot_dimension_numbers<[1], [0], [0], [1], [0, 0, 1, 1], [], []>} : vector<128x12xbf16>, vector<12x128xbf16>, vector<128x128xf32> -> vector<128x128xf32>
    %c1_i32 = arith.constant 1 : i32
    %9 = arith.addi %0, %c1_i32 : i32
    %c16_i32_3 = arith.constant 16 : i32
    %10 = arith.muli %9, %c16_i32_3 : i32
    %11 = tpu.assume_multiple %10, 8 : i32
    %c0_4 = arith.constant 0 : index
    %12 = arith.index_cast %11 : i32 to index
    %c0_5 = arith.constant 0 : index
    %13 = vector.load %arg2[%c0_4, %12, %c0_5] : memref<1x288x12xbf16, #tpu.memory_space<vmem>>, vector<1x128x12xbf16>
    %14 = vector.shape_cast %13 : vector<1x128x12xbf16> to vector<128x12xbf16>
    %c12 = arith.constant 12 : index
    %c0_6 = arith.constant 0 : index
    %15 = vector.load %arg3[%c12, %c0_6] : memref<36x128xbf16, #tpu.memory_space<vmem>>, vector<12x128xbf16>
    %cst_7 = arith.constant dense<0.000000e+00> : vector<128x128xf32>
    %16 = tpu.matmul %14, %15, %cst_7 {dimension_numbers = #tpu.dot_dimension_numbers<[1], [0], [0], [1], [0, 0, 1, 1], [], []>} : vector<128x12xbf16>, vector<12x128xbf16>, vector<128x128xf32> -> vector<128x128xf32>
    %17 = arith.addf %8, %16 : vector<128x128xf32>
    %c2_i32 = arith.constant 2 : i32
    %18 = arith.addi %0, %c2_i32 : i32
    %c16_i32_8 = arith.constant 16 : i32
    %19 = arith.muli %18, %c16_i32_8 : i32
    %20 = tpu.assume_multiple %19, 8 : i32
    %c0_9 = arith.constant 0 : index
    %21 = arith.index_cast %20 : i32 to index
    %c0_10 = arith.constant 0 : index
    %22 = vector.load %arg2[%c0_9, %21, %c0_10] : memref<1x288x12xbf16, #tpu.memory_space<vmem>>, vector<1x128x12xbf16>
    %23 = vector.shape_cast %22 : vector<1x128x12xbf16> to vector<128x12xbf16>
    %c24 = arith.constant 24 : index
    %c0_11 = arith.constant 0 : index
    %24 = vector.load %arg3[%c24, %c0_11] : memref<36x128xbf16, #tpu.memory_space<vmem>>, vector<12x128xbf16>
    %cst_12 = arith.constant dense<0.000000e+00> : vector<128x128xf32>
    %25 = tpu.matmul %23, %24, %cst_12 {dimension_numbers = #tpu.dot_dimension_numbers<[1], [0], [0], [1], [0, 0, 1, 1], [], []>} : vector<128x12xbf16>, vector<12x128xbf16>, vector<128x128xf32> -> vector<128x128xf32>
    %26 = arith.addf %17, %25 : vector<128x128xf32>
    %cst_13 = arith.constant dense<0.000000e+00> : vector<128xf32>
    %27 = vector.multi_reduction <add>, %26, %cst_13 [0] : vector<128x128xf32> to vector<128xf32>
    %28 = vector.shape_cast %27 : vector<128xf32> to vector<1x128xf32>
    %29 = arith.mulf %26, %26 : vector<128x128xf32>
    %cst_14 = arith.constant dense<0.000000e+00> : vector<128xf32>
    %30 = vector.multi_reduction <add>, %29, %cst_14 [0] : vector<128x128xf32> to vector<128xf32>
    %31 = vector.shape_cast %30 : vector<128xf32> to vector<1x128xf32>
    %c0_15 = arith.constant 0 : index
    %c0_16 = arith.constant 0 : index
    %c0_17 = arith.constant 0 : index
    %c0_18 = arith.constant 0 : index
    %32 = vector.load %arg4[%c0_15, %c0_16, %c0_17, %c0_18] : memref<1x1x2x128xf32, #tpu.memory_space<vmem>>, vector<1x1x1x128xf32>
    %33 = vector.shape_cast %32 : vector<1x1x1x128xf32> to vector<1x128xf32>
    %34 = vector.shape_cast %28 : vector<1x128xf32> to vector<1x1x1x128xf32>
    tpu.vector_store %arg4[%c0_15, %c0_16, %c0_17, %c0_18], %34 {strides = array<i32>} : memref<1x1x2x128xf32, #tpu.memory_space<vmem>>, vector<1x1x1x128xf32>,
    %c0_19 = arith.constant 0 : index
    %c0_20 = arith.constant 0 : index
    %c1 = arith.constant 1 : index
    %c0_21 = arith.constant 0 : index
    %35 = vector.load %arg4[%c0_19, %c0_20, %c1, %c0_21] : memref<1x1x2x128xf32, #tpu.memory_space<vmem>>, vector<1x1x1x128xf32>
    %36 = vector.shape_cast %35 : vector<1x1x1x128xf32> to vector<1x128xf32>
    %37 = vector.shape_cast %31 : vector<1x128xf32> to vector<1x1x1x128xf32>
    tpu.vector_store %arg4[%c0_19, %c0_20, %c1, %c0_21], %37 {strides = array<i32>} : memref<1x1x2x128xf32, #tpu.memory_space<vmem>>, vector<1x1x1x128xf32>,
    return
  }
  func.func @transform_0(%arg0: i32, %arg1: i32) -> (i32, i32, i32) {
    %c0_i32 = arith.constant 0 : i32
    %c0_i32_0 = arith.constant 0 : i32
    %c0_i32_1 = arith.constant 0 : i32
    return %arg0, %c0_i32, %c0_i32_0 : i32, i32, i32
  }
  func.func @transform_1(%arg0: i32, %arg1: i32) -> (i32, i32) {
    %c0_i32 = arith.constant 0 : i32
    %c0_i32_0 = arith.constant 0 : i32
    %c0_i32_1 = arith.constant 0 : i32
    return %c0_i32, %c0_i32_0 : i32, i32
  }
  func.func @transform_2(%arg0: i32, %arg1: i32) -> (i32, i32, i32, i32) {
    %c0_i32 = arith.constant 0 : i32
    %c0_i32_0 = arith.constant 0 : i32
    %c0_i32_1 = arith.constant 0 : i32
    return %arg0, %arg1, %c0_i32, %c0_i32_0 : i32, i32, i32, i32
  }
}

module attributes {stable_mosaic.version = 11 : i64} {
  func.func @_out_kernel(%arg0: i32, %arg1: i32, %arg2: memref<1x288x12xbf16, #tpu.memory_space<vmem>>, %arg3: memref<36x128xbf16, #tpu.memory_space<vmem>>, %arg4: memref<1x128xf32, #tpu.memory_space<vmem>>, %arg5: memref<1x128xf32, #tpu.memory_space<vmem>>, %arg6: memref<1x128x8xf32, #tpu.memory_space<vmem>>) attributes {dimension_semantics = [#tpu.dimension_semantics<parallel>, #tpu.dimension_semantics<parallel>], iteration_bounds = array<i64: 2, 2>, scalar_prefetch = 0 : i64, scratch_operands = 0 : i64, tpu.core_type = #tpu.core_type<tc>, window_params = [{transform_indices = @transform_0, window_bounds = array<i64: 1, 288, 12>}, {pipeline_mode = #tpu.pipeline_mode<synchronous>, transform_indices = @transform_1, window_bounds = array<i64: 36, 128>}, {pipeline_mode = #tpu.pipeline_mode<synchronous>, transform_indices = @transform_2, window_bounds = array<i64: 1, 128>}, {pipeline_mode = #tpu.pipeline_mode<synchronous>, transform_indices = @transform_3, window_bounds = array<i64: 1, 128>}, {transform_indices = @transform_4, window_bounds = array<i64: 1, 128, 8>}]} {
    %c0 = arith.constant 0 : index
    %c0_0 = arith.constant 0 : index
    %0 = vector.load %arg4[%c0, %c0_0] : memref<1x128xf32, #tpu.memory_space<vmem>>, vector<1x128xf32>
    %c0_1 = arith.constant 0 : index
    %c0_2 = arith.constant 0 : index
    %1 = vector.load %arg5[%c0_1, %c0_2] : memref<1x128xf32, #tpu.memory_space<vmem>>, vector<1x128xf32>
    %c8_i32 = arith.constant 8 : i32
    %2 = arith.muli %arg1, %c8_i32 : i32
    %c0_i32 = arith.constant 0 : i32
    %3 = arith.addi %2, %c0_i32 : i32
    %c16_i32 = arith.constant 16 : i32
    %4 = arith.muli %3, %c16_i32 : i32
    %5 = tpu.assume_multiple %4, 8 : i32
    %c0_3 = arith.constant 0 : index
    %6 = arith.index_cast %5 : i32 to index
    %c0_4 = arith.constant 0 : index
    %7 = vector.load %arg2[%c0_3, %6, %c0_4] : memref<1x288x12xbf16, #tpu.memory_space<vmem>>, vector<1x128x12xbf16>
    %8 = vector.shape_cast %7 : vector<1x128x12xbf16> to vector<128x12xbf16>
    %c0_5 = arith.constant 0 : index
    %c0_6 = arith.constant 0 : index
    %9 = vector.load %arg3[%c0_5, %c0_6] : memref<36x128xbf16, #tpu.memory_space<vmem>>, vector<12x128xbf16>
    %cst = arith.constant dense<0.000000e+00> : vector<128x128xf32>
    %10 = tpu.matmul %8, %9, %cst {dimension_numbers = #tpu.dot_dimension_numbers<[1], [0], [0], [1], [0, 0, 1, 1], [], []>} : vector<128x12xbf16>, vector<12x128xbf16>, vector<128x128xf32> -> vector<128x128xf32>
    %c1_i32 = arith.constant 1 : i32
    %11 = arith.addi %2, %c1_i32 : i32
    %c16_i32_7 = arith.constant 16 : i32
    %12 = arith.muli %11, %c16_i32_7 : i32
    %13 = tpu.assume_multiple %12, 8 : i32
    %c0_8 = arith.constant 0 : index
    %14 = arith.index_cast %13 : i32 to index
    %c0_9 = arith.constant 0 : index
    %15 = vector.load %arg2[%c0_8, %14, %c0_9] : memref<1x288x12xbf16, #tpu.memory_space<vmem>>, vector<1x128x12xbf16>
    %16 = vector.shape_cast %15 : vector<1x128x12xbf16> to vector<128x12xbf16>
    %c12 = arith.constant 12 : index
    %c0_10 = arith.constant 0 : index
    %17 = vector.load %arg3[%c12, %c0_10] : memref<36x128xbf16, #tpu.memory_space<vmem>>, vector<12x128xbf16>
    %cst_11 = arith.constant dense<0.000000e+00> : vector<128x128xf32>
    %18 = tpu.matmul %16, %17, %cst_11 {dimension_numbers = #tpu.dot_dimension_numbers<[1], [0], [0], [1], [0, 0, 1, 1], [], []>} : vector<128x12xbf16>, vector<12x128xbf16>, vector<128x128xf32> -> vector<128x128xf32>
    %19 = arith.addf %10, %18 : vector<128x128xf32>
    %c2_i32 = arith.constant 2 : i32
    %20 = arith.addi %2, %c2_i32 : i32
    %c16_i32_12 = arith.constant 16 : i32
    %21 = arith.muli %20, %c16_i32_12 : i32
    %22 = tpu.assume_multiple %21, 8 : i32
    %c0_13 = arith.constant 0 : index
    %23 = arith.index_cast %22 : i32 to index
    %c0_14 = arith.constant 0 : index
    %24 = vector.load %arg2[%c0_13, %23, %c0_14] : memref<1x288x12xbf16, #tpu.memory_space<vmem>>, vector<1x128x12xbf16>
    %25 = vector.shape_cast %24 : vector<1x128x12xbf16> to vector<128x12xbf16>
    %c24 = arith.constant 24 : index
    %c0_15 = arith.constant 0 : index
    %26 = vector.load %arg3[%c24, %c0_15] : memref<36x128xbf16, #tpu.memory_space<vmem>>, vector<12x128xbf16>
    %cst_16 = arith.constant dense<0.000000e+00> : vector<128x128xf32>
    %27 = tpu.matmul %25, %26, %cst_16 {dimension_numbers = #tpu.dot_dimension_numbers<[1], [0], [0], [1], [0, 0, 1, 1], [], []>} : vector<128x12xbf16>, vector<12x128xbf16>, vector<128x128xf32> -> vector<128x128xf32>
    %28 = arith.addf %19, %27 : vector<128x128xf32>
    %29 = vector.broadcast %0 : vector<1x128xf32> to vector<128x128xf32>
    %30 = arith.mulf %28, %29 : vector<128x128xf32>
    %31 = vector.broadcast %1 : vector<1x128xf32> to vector<128x128xf32>
    %32 = arith.addf %30, %31 : vector<128x128xf32>
    %cst_17 = arith.constant 0.000000e+00 : f32
    %33 = vector.broadcast %cst_17 : f32 to vector<128x128xf32>
    %34 = arith.maximumf %32, %33 : vector<128x128xf32>
    %35 = vector.extract_strided_slice %34 {offsets = [0, 0], sizes = [128, 8], strides = [1, 1]} : vector<128x128xf32> to vector<128x8xf32>
    %c0_18 = arith.constant 0 : index
    %c0_19 = arith.constant 0 : index
    %c0_20 = arith.constant 0 : index
    %36 = vector.load %arg6[%c0_18, %c0_19, %c0_20] : memref<1x128x8xf32, #tpu.memory_space<vmem>>, vector<1x128x8xf32>
    %37 = vector.shape_cast %36 : vector<1x128x8xf32> to vector<128x8xf32>
    %38 = vector.shape_cast %35 : vector<128x8xf32> to vector<1x128x8xf32>
    tpu.vector_store %arg6[%c0_18, %c0_19, %c0_20], %38 {strides = array<i32>} : memref<1x128x8xf32, #tpu.memory_space<vmem>>, vector<1x128x8xf32>,
    return
  }
  func.func @transform_0(%arg0: i32, %arg1: i32) -> (i32, i32, i32) {
    %c0_i32 = arith.constant 0 : i32
    %c0_i32_0 = arith.constant 0 : i32
    %c0_i32_1 = arith.constant 0 : i32
    return %arg0, %c0_i32, %c0_i32_0 : i32, i32, i32
  }
  func.func @transform_1(%arg0: i32, %arg1: i32) -> (i32, i32) {
    %c0_i32 = arith.constant 0 : i32
    %c0_i32_0 = arith.constant 0 : i32
    %c0_i32_1 = arith.constant 0 : i32
    return %c0_i32, %c0_i32_0 : i32, i32
  }
  func.func @transform_2(%arg0: i32, %arg1: i32) -> (i32, i32) {
    %c0_i32 = arith.constant 0 : i32
    %c0_i32_0 = arith.constant 0 : i32
    %c0_i32_1 = arith.constant 0 : i32
    return %c0_i32, %c0_i32_0 : i32, i32
  }
  func.func @transform_3(%arg0: i32, %arg1: i32) -> (i32, i32) {
    %c0_i32 = arith.constant 0 : i32
    %c0_i32_0 = arith.constant 0 : i32
    %c0_i32_1 = arith.constant 0 : i32
    return %c0_i32, %c0_i32_0 : i32, i32
  }
  func.func @transform_4(%arg0: i32, %arg1: i32) -> (i32, i32, i32) {
    %c0_i32 = arith.constant 0 : i32
    %c0_i32_0 = arith.constant 0 : i32
    return %arg0, %arg1, %c0_i32 : i32, i32, i32
  }
}

</mosaic_0001>

<llo_original>
// kernel: conv_block_forward.2
$region0: #{conv_block_forward.2}
  #allocation0 [shape = 'u32[]', space=smem, size = 0x4, offset = 0x4, fixed_abs, tag = 'smem constant byte address 0x4 - core index']
  #allocation1 [shape = 'u32[72,128]{1,0:T(1,128)}', space=vmem, size = 0x9000, scoped, tag = 'internal scratch']
  %s0 = inlined_call_operand.vmem [shape: bf16[2,288,12], index: 0, kind: input, shape index: {}]
  %s1 = inlined_call_operand.vmem [shape: bf16[36,128], index: 1, kind: input, shape index: {}]
  %s2 = inlined_call_operand.vmem [shape: f32[2,2,2,128], index: 2, kind: output, shape index: {}]
  %s3 = sld [smem:[#allocation0]]
  $region41: #{conv_block_forward.2} parent=0
    _
  %s5 = ssub.s32 1, %s3
  %s6 = scalar_select 0, %s5, %s3
  loop: start=0, step=1, limit=6
  $region2: #{conv_block_forward.2} parent=0 // loop_pre_header
    _
  $region3: #{conv_block_forward.2} parent=0 // loop_header
    %s8 = sphi 0, %s12
    %p9 = scmp.ge.s32.totalorder %s8, 6
    %s15 = sphi 0, %s27
    %s16 = sphi 0, %s23
    %s17 = sphi 0, %s15
    %s18 = sphi 0, %s16
    %s19 = sphi 0, %s17
    %s20 = sphi 0, %s18
    %s30 = sphi 0, %s32
    %s33 = sphi 0, %s30
    %s34 = sphi 0, %s33
    %s50 = sphi 0, %s34
    %s54 = sphi 0, %s54
    %s56 = sphi 0, %s54
    %s57 = sphi 0, %s56
    %s71 = sphi 0, %s57
    %s79 = sphi 0, %s81
    %s82 = sphi 0, %s79
    %s83 = sphi 0, %s82
    %s99 = sphi 0, %s83
  $region4: #{conv_block_forward.2} parent=0 // loop_header_branch
    %11 = sbr.rel (%p9) target = $region8
  $region5: #{conv_block_forward.2} parent=0 // loop_body
    %s13 = ssub.s32 %s8, 1
    %s14 = ssub.s32 %s8, 2
    %s21 = sadd.s32 1, %s16
    %p22 = scmp.ge.s32.totalorder %s21, 2
    %s23 = scalar_select %p22, 0, %s21
    %s24 = sadd.s32 1, %s15
    %s25 = scalar_select %p22, %s24, %s15
    %p26 = scmp.ge.s32.totalorder %s25, 2
    %s27 = scalar_select %p26, 0, %s25
    %s28 = ssub.s32 %s15, %s27
    %p29 = scmp.eq.s32.totalorder %s28, 0
    %s31 = sadd.s32 %s30, 1
    %s32 = scalar_select %p29, %s30, %s31
    %p35 = pneg %p29
    %p36 = scmp.eq.s32.totalorder %s8, 3
    %p37 = por %p35, %p36
    %p38 = scmp.ne.s32.totalorder %s30, %s33
    %p39 = scmp.eq.s32.totalorder %s8, 0
    %p40 = por %p38, %p39
    %p41 = scmp.ne.s32.totalorder %s30, %s33
    %p42 = scmp.eq.s32.totalorder %s13, 3
    %p43 = por %p41, %p42
    %p44 = scmp.ne.s32.totalorder %s33, %s34
    %p45 = scmp.eq.s32.totalorder %s13, 0
    %p46 = por %p44, %p45
    %p47 = scmp.ne.s32.totalorder %s33, %s34
    %p48 = scmp.eq.s32.totalorder %s14, 3
    %p49 = por %p47, %p48
    %p51 = scmp.ne.s32.totalorder %s34, %s50
    %p52 = scmp.eq.s32.totalorder %s14, 0
    %p53 = por %p51, %p52
    %s55 = sadd.s32 %s54, 1
    %p58 = scmp.eq.s32.totalorder %s8, 3
    %p59 = scmp.ne.s32.totalorder %s54, %s56
    %p60 = scmp.eq.s32.totalorder %s8, 0
    %p61 = por %p59, %p60
    %p62 = scmp.ne.s32.totalorder %s54, %s56
    %p63 = scmp.eq.s32.totalorder %s13, 3
    %p64 = por %p62, %p63
    %p65 = scmp.ne.s32.totalorder %s56, %s57
    %p66 = scmp.eq.s32.totalorder %s13, 0
    %p67 = por %p65, %p66
    %p68 = scmp.ne.s32.totalorder %s56, %s57
    %p69 = scmp.eq.s32.totalorder %s14, 3
    %p70 = por %p68, %p69
    %p72 = scmp.ne.s32.totalorder %s57, %s71
    %p73 = scmp.eq.s32.totalorder %s14, 0
    %p74 = por %p72, %p73
    %s75 = ssub.s32 %s15, %s27
    %s76 = ssub.s32 %s16, %s23
    %s77 = sor.u32 %s75, %s76
    %p78 = scmp.eq.s32.totalorder %s77, 0
    %s80 = sadd.s32 %s79, 1
    %s81 = scalar_select %p78, %s79, %s80
    %p84 = pneg %p78
    %p85 = scmp.eq.s32.totalorder %s8, 3
    %p86 = por %p84, %p85
    %p87 = scmp.ne.s32.totalorder %s79, %s82
    %p88 = scmp.eq.s32.totalorder %s8, 0
    %p89 = por %p87, %p88
    %p90 = scmp.ne.s32.totalorder %s79, %s82
    %p91 = scmp.eq.s32.totalorder %s13, 3
    %p92 = por %p90, %p91
    %p93 = scmp.ne.s32.totalorder %s82, %s83
    %p94 = scmp.eq.s32.totalorder %s13, 0
    %p95 = por %p93, %p94
    %p96 = scmp.ne.s32.totalorder %s82, %s83
    %p97 = scmp.eq.s32.totalorder %s14, 3
    %p98 = por %p96, %p97
    %p100 = scmp.ne.s32.totalorder %s83, %s99
    %p101 = scmp.eq.s32.totalorder %s14, 0
    %p102 = por %p100, %p101
    %p103 = scmp.le.s32.totalorder 1, %s8
    %p104 = scmp.lt.s32.totalorder %s8, 5
    %p105 = pnand %p103, %p104
    %p106 = pneg %p105
    // Predicated region
    $region9: #{conv_block_forward.2} parent=5 // pred_check
      _
    $region10: #{conv_block_forward.2} parent=5 // pred_check_branch
      %108 = sbr.rel (%p105) target = $region12
    $region11: #{conv_block_forward.2} parent=5 // pred_region
      %s109 = ssub.s32 %s8, 1
      // Predicated region
      $region13: #{conv_block_forward.2} parent=11 // pred_check
        %p110 = pneg %p67
      $region14: #{conv_block_forward.2} parent=11 // pred_check_branch
        %112 = sbr.rel (%p110) target = $region16
      $region15: #{conv_block_forward.2} parent=11 // pred_region
        _
      $region16: #{conv_block_forward.2} parent=11 // pred_fallthru
        _
    $region12: #{conv_block_forward.2} parent=5 // pred_fallthru
      _
    %p113 = scmp.lt.s32.totalorder %s8, 4
    // Predicated region
    $region17: #{conv_block_forward.2} parent=5 // pred_check
      %p114 = pneg %p113
    $region18: #{conv_block_forward.2} parent=5 // pred_check_branch
      %116 = sbr.rel (%p114) target = $region20
    $region19: #{conv_block_forward.2} parent=5 // pred_region
      // Predicated region
      $region21: #{conv_block_forward.2} parent=19 // pred_check
        %p117 = pneg %p40
      $region22: #{conv_block_forward.2} parent=19 // pred_check_branch
        %119 = sbr.rel (%p117) target = $region24
      $region23: #{conv_block_forward.2} parent=19 // pred_region
        %p120 = scmp.lt.s32.totalorder %s15, 1
        %s121 = scalar_select %p120, %s15, 1
        %s122 = smul.addr %s121, 36
        %s123 = smul.addr %s122, 4
        %s124 = scalar_lea.vmem %s0, %s123
      $region24: #{conv_block_forward.2} parent=19 // pred_fallthru
        _
    $region20: #{conv_block_forward.2} parent=5 // pred_fallthru
      _
    %p125 = scmp.le.s32.totalorder 1, %s8
    %p126 = scmp.lt.s32.totalorder %s8, 5
    %p127 = pnand %p125, %p126
    %p128 = pneg %p127
    // Predicated region
    $region25: #{conv_block_forward.2} parent=5 // pred_check
      _
    $region26: #{conv_block_forward.2} parent=5 // pred_check_branch
      %130 = sbr.rel (%p127) target = $region28
    $region27: #{conv_block_forward.2} parent=5 // pred_region
      %s131 = ssub.s32 %s8, 1
      %p132 = scmp.lt.s32.totalorder %s17, 1
      %s133 = scalar_select %p132, %s17, 1
      %s134 = smul.addr %s133, 36
      %s135 = smul.addr %s134, 4
      %s136 = scalar_lea.vmem %s0, %s135
      %p137 = pneg %p46
      %p138 = pneg %p43
      %p139 = pneg %p67
      %p140 = pneg %p64
      %p141 = pneg %p95
      %p142 = pneg %p92
      %p143 = scmp.lt.s32.totalorder %s17, 1
      %s144 = scalar_select %p143, %s17, 1
      %p145 = scmp.lt.s32.totalorder %s18, 1
      %s146 = scalar_select %p145, %s18, 1
      %s147 = smul.addr %s144, 2
      %s148 = sadd.s32 %s146, %s147
      %s149 = smul.addr %s148, 2
      %s150 = scalar_lea.vmem %s2, %s149
      %p151 = scmp.lt.s32.totalorder %s17, 1
      %s152 = scalar_select %p151, %s17, 1
      %s153 = smul.addr %s152, 36
      %s154 = smul.addr %s153, 4
      %s155 = scalar_lea.vmem %s0, %s154
      %p156 = scmp.lt.s32.totalorder %s17, 1
      %s157 = scalar_select %p156, %s17, 1
      %p158 = scmp.lt.s32.totalorder %s18, 1
      %s159 = scalar_select %p158, %s18, 1
      %s160 = smul.addr %s157, 2
      %s161 = sadd.s32 %s159, %s160
      %s162 = smul.addr %s161, 2
      %s163 = scalar_lea.vmem %s2, %s162
      %s165 = smul.u32 %s18, 8
      %s166 = smul.u32 %s18, 128
      %s167 = sshra.s32 %s166, 3
      %s168 = sand.u32 %s166, 7
      %s169 = smul.addr %s167, 4
      %s170 = scalar_lea.vmem %s155, %s169
      %v171 = vld [vmem:[%s170] sm:$0xf]
      %v172 = vld [vmem:[%s170 + $0x4] sm:$0xf]
      %v173 = vld [vmem:[%s170 + $0x8] sm:$0xf]
      %v174 = vld [vmem:[%s170 + $0xc] sm:$0xf]
      %v175 = vld [vmem:[%s170 + $0x10] sm:$0xf]
      %v176 = vld [vmem:[%s170 + $0x14] sm:$0xf]
      %v177 = vld [vmem:[%s170 + $0x18] sm:$0xf]
      %v178 = vld [vmem:[%s170 + $0x1c] sm:$0xf]
      %v179 = vld [vmem:[%s170 + $0x20] sm:$0xf]
      %v180 = vld [vmem:[%s170 + $0x24] sm:$0xf]
      %v181 = vld [vmem:[%s170 + $0x28] sm:$0xf]
      %v182 = vld [vmem:[%s170 + $0x2c] sm:$0xf]
      %v183 = vld [vmem:[%s170 + $0x30] sm:$0xf]
      %v184 = vld [vmem:[%s170 + $0x34] sm:$0xf]
      %v185 = vld [vmem:[%s170 + $0x38] sm:$0xf]
      %v186 = vld [vmem:[%s170 + $0x3c] sm:$0xf]
      %v187 = vld [vmem:[%s1] sm:$0xf]
      %v188 = vld [vmem:[%s1 + $0x4] sm:$0x3]
      %s189 = sadd.s32 %s165, 1
      %s190 = smul.u32 %s189, 16
      %s191 = sshra.s32 %s190, 3
      %s192 = sand.u32 %s190, 7
      %s193 = smul.addr %s191, 4
      %s194 = scalar_lea.vmem %s155, %s193
      %v195 = vld [vmem:[%s194] sm:$0xf]
      %v196 = vld [vmem:[%s194 + $0x4] sm:$0xf]
      %v197 = vld [vmem:[%s194 + $0x8] sm:$0xf]
      %v198 = vld [vmem:[%s194 + $0xc] sm:$0xf]
      %v199 = vld [vmem:[%s194 + $0x10] sm:$0xf]
      %v200 = vld [vmem:[%s194 + $0x14] sm:$0xf]
      %v201 = vld [vmem:[%s194 + $0x18] sm:$0xf]
      %v202 = vld [vmem:[%s194 + $0x1c] sm:$0xf]
      %v203 = vld [vmem:[%s194 + $0x20] sm:$0xf]
      %v204 = vld [vmem:[%s194 + $0x24] sm:$0xf]
      %v205 = vld [vmem:[%s194 + $0x28] sm:$0xf]
      %v206 = vld [vmem:[%s194 + $0x2c] sm:$0xf]
      %v207 = vld [vmem:[%s194 + $0x30] sm:$0xf]
      %v208 = vld [vmem:[%s194 + $0x34] sm:$0xf]
      %v209 = vld [vmem:[%s194 + $0x38] sm:$0xf]
      %v210 = vld [vmem:[%s194 + $0x3c] sm:$0xf]
      %v211 = vld [vmem:[%s1 + $0x4] sm:$0xc]
      %v212 = vld [vmem:[%s1 + $0x8] sm:$0xf]
      %v229 = vunpack.c.l.b16 %v195
      %v230 = vunpack.c.l.b16 %v196
      %v231 = vunpack.c.l.b16 %v197
      %v232 = vunpack.c.l.b16 %v198
      %v233 = vunpack.c.l.b16 %v199
      %v234 = vunpack.c.l.b16 %v200
      %v235 = vunpack.c.l.b16 %v201
      %v236 = vunpack.c.l.b16 %v202
      %v237 = vunpack.c.l.b16 %v203
      %v238 = vunpack.c.l.b16 %v204
      %v239 = vunpack.c.l.b16 %v205
      %v240 = vunpack.c.l.b16 %v206
      %v241 = vunpack.c.l.b16 %v207
      %v242 = vunpack.c.l.b16 %v208
      %v243 = vunpack.c.l.b16 %v209
      %v244 = vunpack.c.l.b16 %v210
      %v245 = vpack.c.b16 %v230, %v229
      %v246 = vpack.c.b16 %v232, %v231
      %v247 = vpack.c.b16 %v234, %v233
      %v248 = vpack.c.b16 %v236, %v235
      %v249 = vpack.c.b16 %v238, %v237
      %v250 = vpack.c.b16 %v240, %v239
      %v251 = vpack.c.b16 %v242, %v241
      %v252 = vpack.c.b16 %v244, %v243
      %v255 = vunpack.c.l.b16 %v211
      %v256 = vunpack.c.l.b16 %v212
      %v257 = vpack.c.b16 %v256, %v255
      %v258 = vrot.slane %v257, 2
      %vm259 = vcmask 97280
      %v261 = vsel %vm259, %v245, 0
      %v264 = vsel %vm259, %v246, 0
      %v267 = vsel %vm259, %v247, 0
      %v270 = vsel %vm259, %v248, 0
      %v273 = vsel %vm259, %v249, 0
      %v276 = vsel %vm259, %v250, 0
      %v279 = vsel %vm259, %v251, 0
      %v282 = vsel %vm259, %v252, 0
      %vm284 = vcmask 1045504
      %v286 = vsel %vm284, %v258, 0
      %288 = vmatpush.bf16.msra.mxu0 0
      %289 = vmatpush.bf16.msra.mxu0 0
      %290 = vmatpush.bf16.msra.mxu0 0
      %291 = vmatpush.bf16.msra.mxu0 0
      %292 = vmatpush.bf16.msra.mxu0 0
      %293 = vmatpush.bf16.msra.mxu0 0
      %294 = vmatpush.bf16.msra.mxu0 0
      %295 = vmatpush.bf16.msra.mxu0 %v286
      %296 = vmatmul.bf16.gmra.mxu0 %v261
      %v297 = vpop.f32.mrf.mxu0
      %v298 = vadd.f32 0.0, %v297
      %v299 = vpop.f32.mrf.mxu0
      %v300 = vadd.f32 0.0, %v299
      %301 = vmatmul.bf16.gmra.mxu0 %v264
      %v302 = vpop.f32.mrf.mxu0
      %v303 = vadd.f32 0.0, %v302
      %v304 = vpop.f32.mrf.mxu0
      %v305 = vadd.f32 0.0, %v304
      %306 = vmatmul.bf16.gmra.mxu0 %v267
      %v307 = vpop.f32.mrf.mxu0
      %v308 = vadd.f32 0.0, %v307
      %v309 = vpop.f32.mrf.mxu0
      %v310 = vadd.f32 0.0, %v309
      %311 = vmatmul.bf16.gmra.mxu0 %v270
      %v312 = vpop.f32.mrf.mxu0
      %v313 = vadd.f32 0.0, %v312
      %v314 = vpop.f32.mrf.mxu0
      %v315 = vadd.f32 0.0, %v314
      %316 = vmatmul.bf16.gmra.mxu0 %v273
      %v317 = vpop.f32.mrf.mxu0
      %v318 = vadd.f32 0.0, %v317
      %v319 = vpop.f32.mrf.mxu0
      %v320 = vadd.f32 0.0, %v319
      %321 = vmatmul.bf16.gmra.mxu0 %v276
      %v322 = vpop.f32.mrf.mxu0
      %v323 = vadd.f32 0.0, %v322
      %v324 = vpop.f32.mrf.mxu0
      %v325 = vadd.f32 0.0, %v324
      %326 = vmatmul.bf16.gmra.mxu0 %v279
      %v327 = vpop.f32.mrf.mxu0
      %v328 = vadd.f32 0.0, %v327
      %v329 = vpop.f32.mrf.mxu0
      %v330 = vadd.f32 0.0, %v329
      %331 = vmatmul.bf16.gmra.mxu0 %v282
      %v332 = vpop.f32.mrf.mxu0
      %v333 = vadd.f32 0.0, %v332
      %v334 = vpop.f32.mrf.mxu0
      %v335 = vadd.f32 0.0, %v334
      %336 = vdwg.mxu0
      %v353 = vunpack.c.l.b16 %v171
      %v354 = vunpack.c.l.b16 %v172
      %v355 = vunpack.c.l.b16 %v173
      %v356 = vunpack.c.l.b16 %v174
      %v357 = vunpack.c.l.b16 %v175
      %v358 = vunpack.c.l.b16 %v176
      %v359 = vunpack.c.l.b16 %v177
      %v360 = vunpack.c.l.b16 %v178
      %v361 = vunpack.c.l.b16 %v179
      %v362 = vunpack.c.l.b16 %v180
      %v363 = vunpack.c.l.b16 %v181
      %v364 = vunpack.c.l.b16 %v182
      %v365 = vunpack.c.l.b16 %v183
      %v366 = vunpack.c.l.b16 %v184
      %v367 = vunpack.c.l.b16 %v185
      %v368 = vunpack.c.l.b16 %v186
      %v369 = vpack.c.b16 %v354, %v353
      %v370 = vpack.c.b16 %v356, %v355
      %v371 = vpack.c.b16 %v358, %v357
      %v372 = vpack.c.b16 %v360, %v359
      %v373 = vpack.c.b16 %v362, %v361
      %v374 = vpack.c.b16 %v364, %v363
      %v375 = vpack.c.b16 %v366, %v365
      %v376 = vpack.c.b16 %v368, %v367
      %v379 = vunpack.c.l.b16 %v187
      %v380 = vunpack.c.l.b16 %v188
      %v381 = vpack.c.b16 %v380, %v379
      %v383 = vsel %vm259, %v369, 0
      %v386 = vsel %vm259, %v370, 0
      %v389 = vsel %vm259, %v371, 0
      %v392 = vsel %vm259, %v372, 0
      %v395 = vsel %vm259, %v373, 0
      %v398 = vsel %vm259, %v374, 0
      %v401 = vsel %vm259, %v375, 0
      %v404 = vsel %vm259, %v376, 0
      %v407 = vsel %vm284, %v381, 0
      %409 = vmatpush.bf16.msra.mxu0 0
      %410 = vmatpush.bf16.msra.mxu0 0
      %411 = vmatpush.bf16.msra.mxu0 0
      %412 = vmatpush.bf16.msra.mxu0 0
      %413 = vmatpush.bf16.msra.mxu0 0
      %414 = vmatpush.bf16.msra.mxu0 0
      %415 = vmatpush.bf16.msra.mxu0 0
      %416 = vmatpush.bf16.msra.mxu0 %v407
      %417 = vmatmul.bf16.gmra.mxu0 %v383
      %v418 = vpop.f32.mrf.mxu0
      %v419 = vadd.f32 %v298, %v418
      %v420 = vpop.f32.mrf.mxu0
      %v421 = vadd.f32 %v300, %v420
      %422 = vmatmul.bf16.gmra.mxu0 %v386
      %v423 = vpop.f32.mrf.mxu0
      %v424 = vadd.f32 %v303, %v423
      %v425 = vpop.f32.mrf.mxu0
      %v426 = vadd.f32 %v305, %v425
      %427 = vmatmul.bf16.gmra.mxu0 %v389
      %v428 = vpop.f32.mrf.mxu0
      %v429 = vadd.f32 %v308, %v428
      %v430 = vpop.f32.mrf.mxu0
      %v431 = vadd.f32 %v310, %v430
      %432 = vmatmul.bf16.gmra.mxu0 %v392
      %v433 = vpop.f32.mrf.mxu0
      %v434 = vadd.f32 %v313, %v433
      %v435 = vpop.f32.mrf.mxu0
      %v436 = vadd.f32 %v315, %v435
      %437 = vmatmul.bf16.gmra.mxu0 %v395
      %v438 = vpop.f32.mrf.mxu0
      %v439 = vadd.f32 %v318, %v438
      %v440 = vpop.f32.mrf.mxu0
      %v441 = vadd.f32 %v320, %v440
      %442 = vmatmul.bf16.gmra.mxu0 %v398
      %v443 = vpop.f32.mrf.mxu0
      %v444 = vadd.f32 %v323, %v443
      %v445 = vpop.f32.mrf.mxu0
      %v446 = vadd.f32 %v325, %v445
      %447 = vmatmul.bf16.gmra.mxu0 %v401
      %v448 = vpop.f32.mrf.mxu0
      %v449 = vadd.f32 %v328, %v448
      %v450 = vpop.f32.mrf.mxu0
      %v451 = vadd.f32 %v330, %v450
      %452 = vmatmul.bf16.gmra.mxu0 %v404
      %v453 = vpop.f32.mrf.mxu0
      %v454 = vadd.f32 %v333, %v453
      %v455 = vpop.f32.mrf.mxu0
      %v456 = vadd.f32 %v335, %v455
      %457 = vdwg.mxu0
      %s458 = sadd.s32 %s165, 2
      %s459 = smul.u32 %s458, 16
      %s460 = sshra.s32 %s459, 3
      %s461 = sand.u32 %s459, 7
      %s462 = smul.addr %s460, 4
      %s463 = scalar_lea.vmem %s155, %s462
      %v464 = vld [vmem:[%s463] sm:$0xf]
      %v465 = vld [vmem:[%s463 + $0x4] sm:$0xf]
      %v466 = vld [vmem:[%s463 + $0x8] sm:$0xf]
      %v467 = vld [vmem:[%s463 + $0xc] sm:$0xf]
      %v468 = vld [vmem:[%s463 + $0x10] sm:$0xf]
      %v469 = vld [vmem:[%s463 + $0x14] sm:$0xf]
      %v470 = vld [vmem:[%s463 + $0x18] sm:$0xf]
      %v471 = vld [vmem:[%s463 + $0x1c] sm:$0xf]
      %v472 = vld [vmem:[%s463 + $0x20] sm:$0xf]
      %v473 = vld [vmem:[%s463 + $0x24] sm:$0xf]
      %v474 = vld [vmem:[%s463 + $0x28] sm:$0xf]
      %v475 = vld [vmem:[%s463 + $0x2c] sm:$0xf]
      %v476 = vld [vmem:[%s463 + $0x30] sm:$0xf]
      %v477 = vld [vmem:[%s463 + $0x34] sm:$0xf]
      %v478 = vld [vmem:[%s463 + $0x38] sm:$0xf]
      %v479 = vld [vmem:[%s463 + $0x3c] sm:$0xf]
      %v480 = vld [vmem:[%s1 + $0xc] sm:$0xf]
      %v481 = vld [vmem:[%s1 + $0x10] sm:$0x3]
      %v498 = vunpack.c.l.b16 %v464
      %v499 = vunpack.c.l.b16 %v465
      %v500 = vunpack.c.l.b16 %v466
      %v501 = vunpack.c.l.b16 %v467
      %v502 = vunpack.c.l.b16 %v468
      %v503 = vunpack.c.l.b16 %v469
      %v504 = vunpack.c.l.b16 %v470
      %v505 = vunpack.c.l.b16 %v471
      %v506 = vunpack.c.l.b16 %v472
      %v507 = vunpack.c.l.b16 %v473
      %v508 = vunpack.c.l.b16 %v474
      %v509 = vunpack.c.l.b16 %v475
      %v510 = vunpack.c.l.b16 %v476
      %v511 = vunpack.c.l.b16 %v477
      %v512 = vunpack.c.l.b16 %v478
      %v513 = vunpack.c.l.b16 %v479
      %v514 = vpack.c.b16 %v499, %v498
      %v515 = vpack.c.b16 %v501, %v500
      %v516 = vpack.c.b16 %v503, %v502
      %v517 = vpack.c.b16 %v505, %v504
      %v518 = vpack.c.b16 %v507, %v506
      %v519 = vpack.c.b16 %v509, %v508
      %v520 = vpack.c.b16 %v511, %v510
      %v521 = vpack.c.b16 %v513, %v512
      %v524 = vunpack.c.l.b16 %v480
      %v525 = vunpack.c.l.b16 %v481
      %v526 = vpack.c.b16 %v525, %v524
      %v528 = vsel %vm259, %v514, 0
      %v531 = vsel %vm259, %v515, 0
      %v534 = vsel %vm259, %v516, 0
      %v537 = vsel %vm259, %v517, 0
      %v540 = vsel %vm259, %v518, 0
      %v543 = vsel %vm259, %v519, 0
      %v546 = vsel %vm259, %v520, 0
      %v549 = vsel %vm259, %v521, 0
      %v552 = vsel %vm284, %v526, 0
      %554 = vmatpush.bf16.msra.mxu0 0
      %555 = vmatpush.bf16.msra.mxu0 0
      %556 = vmatpush.bf16.msra.mxu0 0
      %557 = vmatpush.bf16.msra.mxu0 0
      %558 = vmatpush.bf16.msra.mxu0 0
      %559 = vmatpush.bf16.msra.mxu0 0
      %560 = vmatpush.bf16.msra.mxu0 0
      %561 = vmatpush.bf16.msra.mxu0 %v552
      %562 = vmatmul.bf16.gmra.mxu0 %v528
      %v563 = vpop.f32.mrf.mxu0
      %v564 = vadd.f32 0.0, %v563
      %v565 = vpop.f32.mrf.mxu0
      %v566 = vadd.f32 0.0, %v565
      %567 = vmatmul.bf16.gmra.mxu0 %v531
      %v568 = vpop.f32.mrf.mxu0
      %v569 = vadd.f32 0.0, %v568
      %v570 = vpop.f32.mrf.mxu0
      %v571 = vadd.f32 0.0, %v570
      %572 = vmatmul.bf16.gmra.mxu0 %v534
      %v573 = vpop.f32.mrf.mxu0
      %v574 = vadd.f32 0.0, %v573
      %v575 = vpop.f32.mrf.mxu0
      %v576 = vadd.f32 0.0, %v575
      %577 = vmatmul.bf16.gmra.mxu0 %v537
      %v578 = vpop.f32.mrf.mxu0
      %v579 = vadd.f32 0.0, %v578
      %v580 = vpop.f32.mrf.mxu0
      %v581 = vadd.f32 0.0, %v580
      %582 = vmatmul.bf16.gmra.mxu0 %v540
      %v583 = vpop.f32.mrf.mxu0
      %v584 = vadd.f32 0.0, %v583
      %v585 = vpop.f32.mrf.mxu0
      %v586 = vadd.f32 0.0, %v585
      %587 = vmatmul.bf16.gmra.mxu0 %v543
      %v588 = vpop.f32.mrf.mxu0
      %v589 = vadd.f32 0.0, %v588
      %v590 = vpop.f32.mrf.mxu0
      %v591 = vadd.f32 0.0, %v590
      %592 = vmatmul.bf16.gmra.mxu0 %v546
      %v593 = vpop.f32.mrf.mxu0
      %v594 = vadd.f32 0.0, %v593
      %v595 = vpop.f32.mrf.mxu0
      %v596 = vadd.f32 0.0, %v595
      %597 = vmatmul.bf16.gmra.mxu0 %v549
      %v598 = vpop.f32.mrf.mxu0
      %v599 = vadd.f32 0.0, %v598
      %v600 = vpop.f32.mrf.mxu0
      %v601 = vadd.f32 0.0, %v600
      %602 = vdwg.mxu0
      %v603 = vadd.f32 %v419, %v564
      %v604 = vadd.f32 %v421, %v566
      %v605 = vadd.f32 %v424, %v569
      %v606 = vadd.f32 %v426, %v571
      %v607 = vadd.f32 %v429, %v574
      %v608 = vadd.f32 %v431, %v576
      %v609 = vadd.f32 %v434, %v579
      %v610 = vadd.f32 %v436, %v581
      %v611 = vadd.f32 %v439, %v584
      %v612 = vadd.f32 %v441, %v586
      %v613 = vadd.f32 %v444, %v589
      %v614 = vadd.f32 %v446, %v591
      %v615 = vadd.f32 %v449, %v594
      %v616 = vadd.f32 %v451, %v596
      %v617 = vadd.f32 %v454, %v599
      %v618 = vadd.f32 %v456, %v601
      %v619 = vadd.f32 %v603, %v604
      %v620 = vadd.f32 %v619, %v605
      %v621 = vadd.f32 %v620, %v606
      %v622 = vadd.f32 %v621, %v607
      %v623 = vadd.f32 %v622, %v608
      %v624 = vadd.f32 %v623, %v609
      %v625 = vadd.f32 %v624, %v610
      %v626 = vadd.f32 %v625, %v611
      %v627 = vadd.f32 %v626, %v612
      %v628 = vadd.f32 %v627, %v613
      %v629 = vadd.f32 %v628, %v614
      %v630 = vadd.f32 %v629, %v615
      %v631 = vadd.f32 %v630, %v616
      %v632 = vadd.f32 %v631, %v617
      %v633 = vadd.f32 %v632, %v618
      %v634 = vrot.slane %v633, 4
      %v635 = vadd.f32 %v633, %v634
      %v636 = vrot.slane %v635, 2
      %v637 = vadd.f32 %v635, %v636
      %v638 = vrot.slane %v637, 1
      %v639 = vadd.f32 %v637, %v638
      %v640 = vmul.f32 %v603, %v603
      %v641 = vmul.f32 %v604, %v604
      %v642 = vmul.f32 %v605, %v605
      %v643 = vmul.f32 %v606, %v606
      %v644 = vmul.f32 %v607, %v607
      %v645 = vmul.f32 %v608, %v608
      %v646 = vmul.f32 %v609, %v609
      %v647 = vmul.f32 %v610, %v610
      %v648 = vmul.f32 %v611, %v611
      %v649 = vmul.f32 %v612, %v612
      %v650 = vmul.f32 %v613, %v613
      %v651 = vmul.f32 %v614, %v614
      %v652 = vmul.f32 %v615, %v615
      %v653 = vmul.f32 %v616, %v616
      %v654 = vmul.f32 %v617, %v617
      %v655 = vmul.f32 %v618, %v618
      %v656 = vadd.f32 %v640, %v641
      %v657 = vadd.f32 %v656, %v642
      %v658 = vadd.f32 %v657, %v643
      %v659 = vadd.f32 %v658, %v644
      %v660 = vadd.f32 %v659, %v645
      %v661 = vadd.f32 %v660, %v646
      %v662 = vadd.f32 %v661, %v647
      %v663 = vadd.f32 %v662, %v648
      %v664 = vadd.f32 %v663, %v649
      %v665 = vadd.f32 %v664, %v650
      %v666 = vadd.f32 %v665, %v651
      %v667 = vadd.f32 %v666, %v652
      %v668 = vadd.f32 %v667, %v653
      %v669 = vadd.f32 %v668, %v654
      %v670 = vadd.f32 %v669, %v655
      %v671 = vrot.slane %v670, 4
      %v672 = vadd.f32 %v670, %v671
      %v673 = vrot.slane %v672, 2
      %v674 = vadd.f32 %v672, %v673
      %v675 = vrot.slane %v674, 1
      %v676 = vadd.f32 %v674, %v675
      %677 = vst [vmem:[%s163] sm:$0x1] %v639
      %678 = vst [vmem:[%s163 + $0x1] sm:$0x1] %v676
      %p679 = scmp.lt.s32.totalorder %s17, 1
      %s680 = scalar_select %p679, %s17, 1
      %p681 = scmp.lt.s32.totalorder %s18, 1
      %s682 = scalar_select %p681, %s18, 1
      %s683 = smul.addr %s680, 2
      %s684 = sadd.s32 %s682, %s683
      %s685 = smul.addr %s684, 2
      %s686 = scalar_lea.vmem %s2, %s685
      // Predicated region
      $region29: #{conv_block_forward.2} parent=27 // pred_check
        %p687 = pneg %p92
      $region30: #{conv_block_forward.2} parent=27 // pred_check_branch
        %689 = sbr.rel (%p687) target = $region32
      $region31: #{conv_block_forward.2} parent=27 // pred_region
        _
      $region32: #{conv_block_forward.2} parent=27 // pred_fallthru
        _
    $region28: #{conv_block_forward.2} parent=5 // pred_fallthru
      _
    %p690 = scmp.le.s32.totalorder 2, %s8
    // Predicated region
    $region33: #{conv_block_forward.2} parent=5 // pred_check
      %p691 = pneg %p690
    $region34: #{conv_block_forward.2} parent=5 // pred_check_branch
      %693 = sbr.rel (%p691) target = $region36
    $region35: #{conv_block_forward.2} parent=5 // pred_region
      %s694 = ssub.s32 %s8, 2
      // Predicated region
      $region37: #{conv_block_forward.2} parent=35 // pred_check
        %p695 = pneg %p98
      $region38: #{conv_block_forward.2} parent=35 // pred_check_branch
        %697 = sbr.rel (%p695) target = $region40
      $region39: #{conv_block_forward.2} parent=35 // pred_region
        %p698 = scmp.lt.s32.totalorder %s19, 1
        %s699 = scalar_select %p698, %s19, 1
        %p700 = scmp.lt.s32.totalorder %s20, 1
        %s701 = scalar_select %p700, %s20, 1
        %s702 = smul.addr %s699, 2
        %s703 = sadd.s32 %s701, %s702
        %s704 = smul.addr %s703, 2
        %s705 = scalar_lea.vmem %s2, %s704
      $region40: #{conv_block_forward.2} parent=35 // pred_fallthru
        _
    $region36: #{conv_block_forward.2} parent=5 // pred_fallthru
      _
  $region6: #{conv_block_forward.2} parent=0 // loop_footer
    %s12 = sadd.s32 1, %s8
  $region7: #{conv_block_forward.2} parent=0 // loop_footer_branch
    %7 = sbr.rel target = $region3
  $region8: #{conv_block_forward.2} parent=0 // loop_exit
    _

// kernel: conv_block_forward.3
$region0: #{conv_block_forward.3}
  #allocation0 [shape = 'u32[]', space=smem, size = 0x4, offset = 0x4, fixed_abs, tag = 'smem constant byte address 0x4 - core index']
  #allocation1 [shape = 'u32[72,128]{1,0:T(1,128)}', space=vmem, size = 0x9000, scoped, tag = 'internal scratch']
  %s0 = inlined_call_operand.vmem [shape: bf16[2,288,12], index: 0, kind: input, shape index: {}]
  %s1 = inlined_call_operand.vmem [shape: bf16[36,128], index: 1, kind: input, shape index: {}]
  %s2 = inlined_call_operand.vmem [shape: f32[1,128], index: 2, kind: input, shape index: {}]
  %s3 = inlined_call_operand.vmem [shape: f32[1,128], index: 3, kind: input, shape index: {}]
  %s4 = inlined_call_operand.vmem [shape: f32[2,256,8], index: 4, kind: output, shape index: {}]
  %s5 = sld [smem:[#allocation0]]
  $region49: #{conv_block_forward.3} parent=0
    _
  %s7 = ssub.s32 1, %s5
  %s8 = scalar_select 0, %s7, %s5
  loop: start=0, step=1, limit=6
  $region2: #{conv_block_forward.3} parent=0 // loop_pre_header
    _
  $region3: #{conv_block_forward.3} parent=0 // loop_header
    %s10 = sphi 0, %s14
    %p11 = scmp.ge.s32.totalorder %s10, 6
    %s17 = sphi 0, %s29
    %s18 = sphi 0, %s25
    %s19 = sphi 0, %s17
    %s20 = sphi 0, %s18
    %s21 = sphi 0, %s19
    %s22 = sphi 0, %s20
    %s32 = sphi 0, %s34
    %s35 = sphi 0, %s32
    %s36 = sphi 0, %s35
    %s52 = sphi 0, %s36
    %s56 = sphi 0, %s56
    %s58 = sphi 0, %s56
    %s59 = sphi 0, %s58
    %s73 = sphi 0, %s59
    %s77 = sphi 0, %s77
    %s79 = sphi 0, %s77
    %s80 = sphi 0, %s79
    %s94 = sphi 0, %s80
    %s98 = sphi 0, %s98
    %s100 = sphi 0, %s98
    %s101 = sphi 0, %s100
    %s115 = sphi 0, %s101
    %s123 = sphi 0, %s125
    %s126 = sphi 0, %s123
    %s127 = sphi 0, %s126
    %s143 = sphi 0, %s127
  $region4: #{conv_block_forward.3} parent=0 // loop_header_branch
    %13 = sbr.rel (%p11) target = $region8
  $region5: #{conv_block_forward.3} parent=0 // loop_body
    %s15 = ssub.s32 %s10, 1
    %s16 = ssub.s32 %s10, 2
    %s23 = sadd.s32 1, %s18
    %p24 = scmp.ge.s32.totalorder %s23, 2
    %s25 = scalar_select %p24, 0, %s23
    %s26 = sadd.s32 1, %s17
    %s27 = scalar_select %p24, %s26, %s17
    %p28 = scmp.ge.s32.totalorder %s27, 2
    %s29 = scalar_select %p28, 0, %s27
    %s30 = ssub.s32 %s17, %s29
    %p31 = scmp.eq.s32.totalorder %s30, 0
    %s33 = sadd.s32 %s32, 1
    %s34 = scalar_select %p31, %s32, %s33
    %p37 = pneg %p31
    %p38 = scmp.eq.s32.totalorder %s10, 3
    %p39 = por %p37, %p38
    %p40 = scmp.ne.s32.totalorder %s32, %s35
    %p41 = scmp.eq.s32.totalorder %s10, 0
    %p42 = por %p40, %p41
    %p43 = scmp.ne.s32.totalorder %s32, %s35
    %p44 = scmp.eq.s32.totalorder %s15, 3
    %p45 = por %p43, %p44
    %p46 = scmp.ne.s32.totalorder %s35, %s36
    %p47 = scmp.eq.s32.totalorder %s15, 0
    %p48 = por %p46, %p47
    %p49 = scmp.ne.s32.totalorder %s35, %s36
    %p50 = scmp.eq.s32.totalorder %s16, 3
    %p51 = por %p49, %p50
    %p53 = scmp.ne.s32.totalorder %s36, %s52
    %p54 = scmp.eq.s32.totalorder %s16, 0
    %p55 = por %p53, %p54
    %s57 = sadd.s32 %s56, 1
    %p60 = scmp.eq.s32.totalorder %s10, 3
    %p61 = scmp.ne.s32.totalorder %s56, %s58
    %p62 = scmp.eq.s32.totalorder %s10, 0
    %p63 = por %p61, %p62
    %p64 = scmp.ne.s32.totalorder %s56, %s58
    %p65 = scmp.eq.s32.totalorder %s15, 3
    %p66 = por %p64, %p65
    %p67 = scmp.ne.s32.totalorder %s58, %s59
    %p68 = scmp.eq.s32.totalorder %s15, 0
    %p69 = por %p67, %p68
    %p70 = scmp.ne.s32.totalorder %s58, %s59
    %p71 = scmp.eq.s32.totalorder %s16, 3
    %p72 = por %p70, %p71
    %p74 = scmp.ne.s32.totalorder %s59, %s73
    %p75 = scmp.eq.s32.totalorder %s16, 0
    %p76 = por %p74, %p75
    %s78 = sadd.s32 %s77, 1
    %p81 = scmp.eq.s32.totalorder %s10, 3
    %p82 = scmp.ne.s32.totalorder %s77, %s79
    %p83 = scmp.eq.s32.totalorder %s10, 0
    %p84 = por %p82, %p83
    %p85 = scmp.ne.s32.totalorder %s77, %s79
    %p86 = scmp.eq.s32.totalorder %s15, 3
    %p87 = por %p85, %p86
    %p88 = scmp.ne.s32.totalorder %s79, %s80
    %p89 = scmp.eq.s32.totalorder %s15, 0
    %p90 = por %p88, %p89
    %p91 = scmp.ne.s32.totalorder %s79, %s80
    %p92 = scmp.eq.s32.totalorder %s16, 3
    %p93 = por %p91, %p92
    %p95 = scmp.ne.s32.totalorder %s80, %s94
    %p96 = scmp.eq.s32.totalorder %s16, 0
    %p97 = por %p95, %p96
    %s99 = sadd.s32 %s98, 1
    %p102 = scmp.eq.s32.totalorder %s10, 3
    %p103 = scmp.ne.s32.totalorder %s98, %s100
    %p104 = scmp.eq.s32.totalorder %s10, 0
    %p105 = por %p103, %p104
    %p106 = scmp.ne.s32.totalorder %s98, %s100
    %p107 = scmp.eq.s32.totalorder %s15, 3
    %p108 = por %p106, %p107
    %p109 = scmp.ne.s32.totalorder %s100, %s101
    %p110 = scmp.eq.s32.totalorder %s15, 0
    %p111 = por %p109, %p110
    %p112 = scmp.ne.s32.totalorder %s100, %s101
    %p113 = scmp.eq.s32.totalorder %s16, 3
    %p114 = por %p112, %p113
    %p116 = scmp.ne.s32.totalorder %s101, %s115
    %p117 = scmp.eq.s32.totalorder %s16, 0
    %p118 = por %p116, %p117
    %s119 = ssub.s32 %s17, %s29
    %s120 = ssub.s32 %s18, %s25
    %s121 = sor.u32 %s119, %s120
    %p122 = scmp.eq.s32.totalorder %s121, 0
    %s124 = sadd.s32 %s123, 1
    %s125 = scalar_select %p122, %s123, %s124
    %p128 = pneg %p122
    %p129 = scmp.eq.s32.totalorder %s10, 3
    %p130 = por %p128, %p129
    %p131 = scmp.ne.s32.totalorder %s123, %s126
    %p132 = scmp.eq.s32.totalorder %s10, 0
    %p133 = por %p131, %p132
    %p134 = scmp.ne.s32.totalorder %s123, %s126
    %p135 = scmp.eq.s32.totalorder %s15, 3
    %p136 = por %p134, %p135
    %p137 = scmp.ne.s32.totalorder %s126, %s127
    %p138 = scmp.eq.s32.totalorder %s15, 0
    %p139 = por %p137, %p138
    %p140 = scmp.ne.s32.totalorder %s126, %s127
    %p141 = scmp.eq.s32.totalorder %s16, 3
    %p142 = por %p140, %p141
    %p144 = scmp.ne.s32.totalorder %s127, %s143
    %p145 = scmp.eq.s32.totalorder %s16, 0
    %p146 = por %p144, %p145
    %p147 = scmp.le.s32.totalorder 1, %s10
    %p148 = scmp.lt.s32.totalorder %s10, 5
    %p149 = pnand %p147, %p148
    %p150 = pneg %p149
    // Predicated region
    $region9: #{conv_block_forward.3} parent=5 // pred_check
      _
    $region10: #{conv_block_forward.3} parent=5 // pred_check_branch
      %152 = sbr.rel (%p149) target = $region12
    $region11: #{conv_block_forward.3} parent=5 // pred_region
      %s153 = ssub.s32 %s10, 1
      // Predicated region
      $region13: #{conv_block_forward.3} parent=11 // pred_check
        %p154 = pneg %p69
      $region14: #{conv_block_forward.3} parent=11 // pred_check_branch
        %156 = sbr.rel (%p154) target = $region16
      $region15: #{conv_block_forward.3} parent=11 // pred_region
        _
      $region16: #{conv_block_forward.3} parent=11 // pred_fallthru
        _
      // Predicated region
      $region17: #{conv_block_forward.3} parent=11 // pred_check
        %p157 = pneg %p90
      $region18: #{conv_block_forward.3} parent=11 // pred_check_branch
        %159 = sbr.rel (%p157) target = $region20
      $region19: #{conv_block_forward.3} parent=11 // pred_region
        _
      $region20: #{conv_block_forward.3} parent=11 // pred_fallthru
        _
      // Predicated region
      $region21: #{conv_block_forward.3} parent=11 // pred_check
        %p160 = pneg %p111
      $region22: #{conv_block_forward.3} parent=11 // pred_check_branch
        %162 = sbr.rel (%p160) target = $region24
      $region23: #{conv_block_forward.3} parent=11 // pred_region
        _
      $region24: #{conv_block_forward.3} parent=11 // pred_fallthru
        _
    $region12: #{conv_block_forward.3} parent=5 // pred_fallthru
      _
    %p163 = scmp.lt.s32.totalorder %s10, 4
    // Predicated region
    $region25: #{conv_block_forward.3} parent=5 // pred_check
      %p164 = pneg %p163
    $region26: #{conv_block_forward.3} parent=5 // pred_check_branch
      %166 = sbr.rel (%p164) target = $region28
    $region27: #{conv_block_forward.3} parent=5 // pred_region
      // Predicated region
      $region29: #{conv_block_forward.3} parent=27 // pred_check
        %p167 = pneg %p42
      $region30: #{conv_block_forward.3} parent=27 // pred_check_branch
        %169 = sbr.rel (%p167) target = $region32
      $region31: #{conv_block_forward.3} parent=27 // pred_region
        %p170 = scmp.lt.s32.totalorder %s17, 1
        %s171 = scalar_select %p170, %s17, 1
        %s172 = smul.addr %s171, 36
        %s173 = smul.addr %s172, 4
        %s174 = scalar_lea.vmem %s0, %s173
      $region32: #{conv_block_forward.3} parent=27 // pred_fallthru
        _
    $region28: #{conv_block_forward.3} parent=5 // pred_fallthru
      _
    %p175 = scmp.le.s32.totalorder 1, %s10
    %p176 = scmp.lt.s32.totalorder %s10, 5
    %p177 = pnand %p175, %p176
    %p178 = pneg %p177
    // Predicated region
    $region33: #{conv_block_forward.3} parent=5 // pred_check
      _
    $region34: #{conv_block_forward.3} parent=5 // pred_check_branch
      %180 = sbr.rel (%p177) target = $region36
    $region35: #{conv_block_forward.3} parent=5 // pred_region
      %s181 = ssub.s32 %s10, 1
      %p182 = scmp.lt.s32.totalorder %s19, 1
      %s183 = scalar_select %p182, %s19, 1
      %s184 = smul.addr %s183, 36
      %s185 = smul.addr %s184, 4
      %s186 = scalar_lea.vmem %s0, %s185
      %p187 = pneg %p48
      %p188 = pneg %p45
      %p189 = pneg %p69
      %p190 = pneg %p66
      %p191 = pneg %p90
      %p192 = pneg %p87
      %p193 = pneg %p111
      %p194 = pneg %p108
      %p195 = pneg %p139
      %p196 = pneg %p136
      %s197 = smul.u32 16, %s20
      %p198 = scmp.lt.s32.totalorder %s19, 1
      %s199 = scalar_select %p198, %s19, 1
      %p200 = scmp.lt.s32.totalorder %s197, 31
      %s201 = scalar_select %p200, %s197, 31
      %s202 = smul.addr %s199, 32
      %s203 = sadd.s32 %s201, %s202
      %s204 = smul.addr %s203, 8
      %s205 = scalar_lea.vmem %s4, %s204
      %p206 = scmp.lt.s32.totalorder %s19, 1
      %s207 = scalar_select %p206, %s19, 1
      %s208 = smul.addr %s207, 36
      %s209 = smul.addr %s208, 4
      %s210 = scalar_lea.vmem %s0, %s209
      %s211 = smul.u32 16, %s20
      %p212 = scmp.lt.s32.totalorder %s19, 1
      %s213 = scalar_select %p212, %s19, 1
      %p214 = scmp.lt.s32.totalorder %s211, 31
      %s215 = scalar_select %p214, %s211, 31
      %s216 = smul.addr %s213, 32
      %s217 = sadd.s32 %s215, %s216
      %s218 = smul.addr %s217, 8
      %s219 = scalar_lea.vmem %s4, %s218
      %s220 = smul.u32 16, %s20
      %v222 = vld [vmem:[%s2] sm:$0x1]
      %v223 = vld [vmem:[%s3] sm:$0x1]
      %s224 = smul.u32 %s20, 8
      %s225 = smul.u32 %s20, 128
      %s226 = sshra.s32 %s225, 3
      %s227 = sand.u32 %s225, 7
      %s228 = smul.addr %s226, 4
      %s229 = scalar_lea.vmem %s210, %s228
      %v230 = vld [vmem:[%s229] sm:$0xf]
      %v231 = vld [vmem:[%s229 + $0x4] sm:$0xf]
      %v232 = vld [vmem:[%s229 + $0x8] sm:$0xf]
      %v233 = vld [vmem:[%s229 + $0xc] sm:$0xf]
      %v234 = vld [vmem:[%s229 + $0x10] sm:$0xf]
      %v235 = vld [vmem:[%s229 + $0x14] sm:$0xf]
      %v236 = vld [vmem:[%s229 + $0x18] sm:$0xf]
      %v237 = vld [vmem:[%s229 + $0x1c] sm:$0xf]
      %v238 = vld [vmem:[%s229 + $0x20] sm:$0xf]
      %v239 = vld [vmem:[%s229 + $0x24] sm:$0xf]
      %v240 = vld [vmem:[%s229 + $0x28] sm:$0xf]
      %v241 = vld [vmem:[%s229 + $0x2c] sm:$0xf]
      %v242 = vld [vmem:[%s229 + $0x30] sm:$0xf]
      %v243 = vld [vmem:[%s229 + $0x34] sm:$0xf]
      %v244 = vld [vmem:[%s229 + $0x38] sm:$0xf]
      %v245 = vld [vmem:[%s229 + $0x3c] sm:$0xf]
      %v246 = vld [vmem:[%s1] sm:$0xf]
      %v247 = vld [vmem:[%s1 + $0x4] sm:$0x3]
      %s248 = sadd.s32 %s224, 1
      %s249 = smul.u32 %s248, 16
      %s250 = sshra.s32 %s249, 3
      %s251 = sand.u32 %s249, 7
      %s252 = smul.addr %s250, 4
      %s253 = scalar_lea.vmem %s210, %s252
      %v254 = vld [vmem:[%s253] sm:$0xf]
      %v255 = vld [vmem:[%s253 + $0x4] sm:$0xf]
      %v256 = vld [vmem:[%s253 + $0x8] sm:$0xf]
      %v257 = vld [vmem:[%s253 + $0xc] sm:$0xf]
      %v258 = vld [vmem:[%s253 + $0x10] sm:$0xf]
      %v259 = vld [vmem:[%s253 + $0x14] sm:$0xf]
      %v260 = vld [vmem:[%s253 + $0x18] sm:$0xf]
      %v261 = vld [vmem:[%s253 + $0x1c] sm:$0xf]
      %v262 = vld [vmem:[%s253 + $0x20] sm:$0xf]
      %v263 = vld [vmem:[%s253 + $0x24] sm:$0xf]
      %v264 = vld [vmem:[%s253 + $0x28] sm:$0xf]
      %v265 = vld [vmem:[%s253 + $0x2c] sm:$0xf]
      %v266 = vld [vmem:[%s253 + $0x30] sm:$0xf]
      %v267 = vld [vmem:[%s253 + $0x34] sm:$0xf]
      %v268 = vld [vmem:[%s253 + $0x38] sm:$0xf]
      %v269 = vld [vmem:[%s253 + $0x3c] sm:$0xf]
      %v270 = vld [vmem:[%s1 + $0x4] sm:$0xc]
      %v271 = vld [vmem:[%s1 + $0x8] sm:$0xf]
      %v288 = vunpack.c.l.b16 %v254
      %v289 = vunpack.c.l.b16 %v255
      %v290 = vunpack.c.l.b16 %v256
      %v291 = vunpack.c.l.b16 %v257
      %v292 = vunpack.c.l.b16 %v258
      %v293 = vunpack.c.l.b16 %v259
      %v294 = vunpack.c.l.b16 %v260
      %v295 = vunpack.c.l.b16 %v261
      %v296 = vunpack.c.l.b16 %v262
      %v297 = vunpack.c.l.b16 %v263
      %v298 = vunpack.c.l.b16 %v264
      %v299 = vunpack.c.l.b16 %v265
      %v300 = vunpack.c.l.b16 %v266
      %v301 = vunpack.c.l.b16 %v267
      %v302 = vunpack.c.l.b16 %v268
      %v303 = vunpack.c.l.b16 %v269
      %v304 = vpack.c.b16 %v289, %v288
      %v305 = vpack.c.b16 %v291, %v290
      %v306 = vpack.c.b16 %v293, %v292
      %v307 = vpack.c.b16 %v295, %v294
      %v308 = vpack.c.b16 %v297, %v296
      %v309 = vpack.c.b16 %v299, %v298
      %v310 = vpack.c.b16 %v301, %v300
      %v311 = vpack.c.b16 %v303, %v302
      %v314 = vunpack.c.l.b16 %v270
      %v315 = vunpack.c.l.b16 %v271
      %v316 = vpack.c.b16 %v315, %v314
      %v317 = vrot.slane %v316, 2
      %vm318 = vcmask 97280
      %v320 = vsel %vm318, %v304, 0
      %v323 = vsel %vm318, %v305, 0
      %v326 = vsel %vm318, %v306, 0
      %v329 = vsel %vm318, %v307, 0
      %v332 = vsel %vm318, %v308, 0
      %v335 = vsel %vm318, %v309, 0
      %v338 = vsel %vm318, %v310, 0
      %v341 = vsel %vm318, %v311, 0
      %vm343 = vcmask 1045504
      %v345 = vsel %vm343, %v317, 0
      %347 = vmatpush.bf16.msra.mxu0 0
      %348 = vmatpush.bf16.msra.mxu0 0
      %349 = vmatpush.bf16.msra.mxu0 0
      %350 = vmatpush.bf16.msra.mxu0 0
      %351 = vmatpush.bf16.msra.mxu0 0
      %352 = vmatpush.bf16.msra.mxu0 0
      %353 = vmatpush.bf16.msra.mxu0 0
      %354 = vmatpush.bf16.msra.mxu0 %v345
      %355 = vmatmul.bf16.gmra.mxu0 %v320
      %v356 = vpop.f32.mrf.mxu0
      %v357 = vadd.f32 0.0, %v356
      %v358 = vpop.f32.mrf.mxu0
      %v359 = vadd.f32 0.0, %v358
      %360 = vmatmul.bf16.gmra.mxu0 %v323
      %v361 = vpop.f32.mrf.mxu0
      %v362 = vadd.f32 0.0, %v361
      %v363 = vpop.f32.mrf.mxu0
      %v364 = vadd.f32 0.0, %v363
      %365 = vmatmul.bf16.gmra.mxu0 %v326
      %v366 = vpop.f32.mrf.mxu0
      %v367 = vadd.f32 0.0, %v366
      %v368 = vpop.f32.mrf.mxu0
      %v369 = vadd.f32 0.0, %v368
      %370 = vmatmul.bf16.gmra.mxu0 %v329
      %v371 = vpop.f32.mrf.mxu0
      %v372 = vadd.f32 0.0, %v371
      %v373 = vpop.f32.mrf.mxu0
      %v374 = vadd.f32 0.0, %v373
      %375 = vmatmul.bf16.gmra.mxu0 %v332
      %v376 = vpop.f32.mrf.mxu0
      %v377 = vadd.f32 0.0, %v376
      %v378 = vpop.f32.mrf.mxu0
      %v379 = vadd.f32 0.0, %v378
      %380 = vmatmul.bf16.gmra.mxu0 %v335
      %v381 = vpop.f32.mrf.mxu0
      %v382 = vadd.f32 0.0, %v381
      %v383 = vpop.f32.mrf.mxu0
      %v384 = vadd.f32 0.0, %v383
      %385 = vmatmul.bf16.gmra.mxu0 %v338
      %v386 = vpop.f32.mrf.mxu0
      %v387 = vadd.f32 0.0, %v386
      %v388 = vpop.f32.mrf.mxu0
      %v389 = vadd.f32 0.0, %v388
      %390 = vmatmul.bf16.gmra.mxu0 %v341
      %v391 = vpop.f32.mrf.mxu0
      %v392 = vadd.f32 0.0, %v391
      %v393 = vpop.f32.mrf.mxu0
      %v394 = vadd.f32 0.0, %v393
      %395 = vdwg.mxu0
      %v412 = vunpack.c.l.b16 %v230
      %v413 = vunpack.c.l.b16 %v231
      %v414 = vunpack.c.l.b16 %v232
      %v415 = vunpack.c.l.b16 %v233
      %v416 = vunpack.c.l.b16 %v234
      %v417 = vunpack.c.l.b16 %v235
      %v418 = vunpack.c.l.b16 %v236
      %v419 = vunpack.c.l.b16 %v237
      %v420 = vunpack.c.l.b16 %v238
      %v421 = vunpack.c.l.b16 %v239
      %v422 = vunpack.c.l.b16 %v240
      %v423 = vunpack.c.l.b16 %v241
      %v424 = vunpack.c.l.b16 %v242
      %v425 = vunpack.c.l.b16 %v243
      %v426 = vunpack.c.l.b16 %v244
      %v427 = vunpack.c.l.b16 %v245
      %v428 = vpack.c.b16 %v413, %v412
      %v429 = vpack.c.b16 %v415, %v414
      %v430 = vpack.c.b16 %v417, %v416
      %v431 = vpack.c.b16 %v419, %v418
      %v432 = vpack.c.b16 %v421, %v420
      %v433 = vpack.c.b16 %v423, %v422
      %v434 = vpack.c.b16 %v425, %v424
      %v435 = vpack.c.b16 %v427, %v426
      %v438 = vunpack.c.l.b16 %v246
      %v439 = vunpack.c.l.b16 %v247
      %v440 = vpack.c.b16 %v439, %v438
      %v442 = vsel %vm318, %v428, 0
      %v445 = vsel %vm318, %v429, 0
      %v448 = vsel %vm318, %v430, 0
      %v451 = vsel %vm318, %v431, 0
      %v454 = vsel %vm318, %v432, 0
      %v457 = vsel %vm318, %v433, 0
      %v460 = vsel %vm318, %v434, 0
      %v463 = vsel %vm318, %v435, 0
      %v466 = vsel %vm343, %v440, 0
      %468 = vmatpush.bf16.msra.mxu0 0
      %469 = vmatpush.bf16.msra.mxu0 0
      %470 = vmatpush.bf16.msra.mxu0 0
      %471 = vmatpush.bf16.msra.mxu0 0
      %472 = vmatpush.bf16.msra.mxu0 0
      %473 = vmatpush.bf16.msra.mxu0 0
      %474 = vmatpush.bf16.msra.mxu0 0
      %475 = vmatpush.bf16.msra.mxu0 %v466
      %476 = vmatmul.bf16.gmra.mxu0 %v442
      %v477 = vpop.f32.mrf.mxu0
      %v478 = vadd.f32 %v357, %v477
      %v479 = vpop.f32.mrf.mxu0
      %v480 = vadd.f32 %v359, %v479
      %481 = vmatmul.bf16.gmra.mxu0 %v445
      %v482 = vpop.f32.mrf.mxu0
      %v483 = vadd.f32 %v362, %v482
      %v484 = vpop.f32.mrf.mxu0
      %v485 = vadd.f32 %v364, %v484
      %486 = vmatmul.bf16.gmra.mxu0 %v448
      %v487 = vpop.f32.mrf.mxu0
      %v488 = vadd.f32 %v367, %v487
      %v489 = vpop.f32.mrf.mxu0
      %v490 = vadd.f32 %v369, %v489
      %491 = vmatmul.bf16.gmra.mxu0 %v451
      %v492 = vpop.f32.mrf.mxu0
      %v493 = vadd.f32 %v372, %v492
      %v494 = vpop.f32.mrf.mxu0
      %v495 = vadd.f32 %v374, %v494
      %496 = vmatmul.bf16.gmra.mxu0 %v454
      %v497 = vpop.f32.mrf.mxu0
      %v498 = vadd.f32 %v377, %v497
      %v499 = vpop.f32.mrf.mxu0
      %v500 = vadd.f32 %v379, %v499
      %501 = vmatmul.bf16.gmra.mxu0 %v457
      %v502 = vpop.f32.mrf.mxu0
      %v503 = vadd.f32 %v382, %v502
      %v504 = vpop.f32.mrf.mxu0
      %v505 = vadd.f32 %v384, %v504
      %506 = vmatmul.bf16.gmra.mxu0 %v460
      %v507 = vpop.f32.mrf.mxu0
      %v508 = vadd.f32 %v387, %v507
      %v509 = vpop.f32.mrf.mxu0
      %v510 = vadd.f32 %v389, %v509
      %511 = vmatmul.bf16.gmra.mxu0 %v463
      %v512 = vpop.f32.mrf.mxu0
      %v513 = vadd.f32 %v392, %v512
      %v514 = vpop.f32.mrf.mxu0
      %v515 = vadd.f32 %v394, %v514
      %516 = vdwg.mxu0
      %s517 = sadd.s32 %s224, 2
      %s518 = smul.u32 %s517, 16
      %s519 = sshra.s32 %s518, 3
      %s520 = sand.u32 %s518, 7
      %s521 = smul.addr %s519, 4
      %s522 = scalar_lea.vmem %s210, %s521
      %v523 = vld [vmem:[%s522] sm:$0xf]
      %v524 = vld [vmem:[%s522 + $0x4] sm:$0xf]
      %v525 = vld [vmem:[%s522 + $0x8] sm:$0xf]
      %v526 = vld [vmem:[%s522 + $0xc] sm:$0xf]
      %v527 = vld [vmem:[%s522 + $0x10] sm:$0xf]
      %v528 = vld [vmem:[%s522 + $0x14] sm:$0xf]
      %v529 = vld [vmem:[%s522 + $0x18] sm:$0xf]
      %v530 = vld [vmem:[%s522 + $0x1c] sm:$0xf]
      %v531 = vld [vmem:[%s522 + $0x20] sm:$0xf]
      %v532 = vld [vmem:[%s522 + $0x24] sm:$0xf]
      %v533 = vld [vmem:[%s522 + $0x28] sm:$0xf]
      %v534 = vld [vmem:[%s522 + $0x2c] sm:$0xf]
      %v535 = vld [vmem:[%s522 + $0x30] sm:$0xf]
      %v536 = vld [vmem:[%s522 + $0x34] sm:$0xf]
      %v537 = vld [vmem:[%s522 + $0x38] sm:$0xf]
      %v538 = vld [vmem:[%s522 + $0x3c] sm:$0xf]
      %v539 = vld [vmem:[%s1 + $0xc] sm:$0xf]
      %v540 = vld [vmem:[%s1 + $0x10] sm:$0x3]
      %v557 = vunpack.c.l.b16 %v523
      %v558 = vunpack.c.l.b16 %v524
      %v559 = vunpack.c.l.b16 %v525
      %v560 = vunpack.c.l.b16 %v526
      %v561 = vunpack.c.l.b16 %v527
      %v562 = vunpack.c.l.b16 %v528
      %v563 = vunpack.c.l.b16 %v529
      %v564 = vunpack.c.l.b16 %v530
      %v565 = vunpack.c.l.b16 %v531
      %v566 = vunpack.c.l.b16 %v532
      %v567 = vunpack.c.l.b16 %v533
      %v568 = vunpack.c.l.b16 %v534
      %v569 = vunpack.c.l.b16 %v535
      %v570 = vunpack.c.l.b16 %v536
      %v571 = vunpack.c.l.b16 %v537
      %v572 = vunpack.c.l.b16 %v538
      %v573 = vpack.c.b16 %v558, %v557
      %v574 = vpack.c.b16 %v560, %v559
      %v575 = vpack.c.b16 %v562, %v561
      %v576 = vpack.c.b16 %v564, %v563
      %v577 = vpack.c.b16 %v566, %v565
      %v578 = vpack.c.b16 %v568, %v567
      %v579 = vpack.c.b16 %v570, %v569
      %v580 = vpack.c.b16 %v572, %v571
      %v583 = vunpack.c.l.b16 %v539
      %v584 = vunpack.c.l.b16 %v540
      %v585 = vpack.c.b16 %v584, %v583
      %v587 = vsel %vm318, %v573, 0
      %v590 = vsel %vm318, %v574, 0
      %v593 = vsel %vm318, %v575, 0
      %v596 = vsel %vm318, %v576, 0
      %v599 = vsel %vm318, %v577, 0
      %v602 = vsel %vm318, %v578, 0
      %v605 = vsel %vm318, %v579, 0
      %v608 = vsel %vm318, %v580, 0
      %v611 = vsel %vm343, %v585, 0
      %613 = vmatpush.bf16.msra.mxu0 0
      %614 = vmatpush.bf16.msra.mxu0 0
      %615 = vmatpush.bf16.msra.mxu0 0
      %616 = vmatpush.bf16.msra.mxu0 0
      %617 = vmatpush.bf16.msra.mxu0 0
      %618 = vmatpush.bf16.msra.mxu0 0
      %619 = vmatpush.bf16.msra.mxu0 0
      %620 = vmatpush.bf16.msra.mxu0 %v611
      %621 = vmatmul.bf16.gmra.mxu0 %v587
      %v622 = vpop.f32.mrf.mxu0
      %v623 = vadd.f32 0.0, %v622
      %v624 = vpop.f32.mrf.mxu0
      %v625 = vadd.f32 0.0, %v624
      %626 = vmatmul.bf16.gmra.mxu0 %v590
      %v627 = vpop.f32.mrf.mxu0
      %v628 = vadd.f32 0.0, %v627
      %v629 = vpop.f32.mrf.mxu0
      %v630 = vadd.f32 0.0, %v629
      %631 = vmatmul.bf16.gmra.mxu0 %v593
      %v632 = vpop.f32.mrf.mxu0
      %v633 = vadd.f32 0.0, %v632
      %v634 = vpop.f32.mrf.mxu0
      %v635 = vadd.f32 0.0, %v634
      %636 = vmatmul.bf16.gmra.mxu0 %v596
      %v637 = vpop.f32.mrf.mxu0
      %v638 = vadd.f32 0.0, %v637
      %v639 = vpop.f32.mrf.mxu0
      %v640 = vadd.f32 0.0, %v639
      %641 = vmatmul.bf16.gmra.mxu0 %v599
      %v642 = vpop.f32.mrf.mxu0
      %v643 = vadd.f32 0.0, %v642
      %v644 = vpop.f32.mrf.mxu0
      %v645 = vadd.f32 0.0, %v644
      %646 = vmatmul.bf16.gmra.mxu0 %v602
      %v647 = vpop.f32.mrf.mxu0
      %v648 = vadd.f32 0.0, %v647
      %v649 = vpop.f32.mrf.mxu0
      %v650 = vadd.f32 0.0, %v649
      %651 = vmatmul.bf16.gmra.mxu0 %v605
      %v652 = vpop.f32.mrf.mxu0
      %v653 = vadd.f32 0.0, %v652
      %v654 = vpop.f32.mrf.mxu0
      %v655 = vadd.f32 0.0, %v654
      %656 = vmatmul.bf16.gmra.mxu0 %v608
      %v657 = vpop.f32.mrf.mxu0
      %v658 = vadd.f32 0.0, %v657
      %v659 = vpop.f32.mrf.mxu0
      %v660 = vadd.f32 0.0, %v659
      %661 = vdwg.mxu0
      %v662 = vadd.f32 %v478, %v623
      %v663 = vadd.f32 %v480, %v625
      %v664 = vadd.f32 %v483, %v628
      %v665 = vadd.f32 %v485, %v630
      %v666 = vadd.f32 %v488, %v633
      %v667 = vadd.f32 %v490, %v635
      %v668 = vadd.f32 %v493, %v638
      %v669 = vadd.f32 %v495, %v640
      %v670 = vadd.f32 %v498, %v643
      %v671 = vadd.f32 %v500, %v645
      %v672 = vadd.f32 %v503, %v648
      %v673 = vadd.f32 %v505, %v650
      %v674 = vadd.f32 %v508, %v653
      %v675 = vadd.f32 %v510, %v655
      %v676 = vadd.f32 %v513, %v658
      %v677 = vadd.f32 %v515, %v660
      %v679 = vperm.slane %v222, 0
      %v681 = vmul.f32 %v662, %v679
      %v682 = vmul.f32 %v663, %v679
      %v683 = vmul.f32 %v664, %v679
      %v684 = vmul.f32 %v665, %v679
      %v685 = vmul.f32 %v666, %v679
      %v686 = vmul.f32 %v667, %v679
      %v687 = vmul.f32 %v668, %v679
      %v688 = vmul.f32 %v669, %v679
      %v689 = vmul.f32 %v670, %v679
      %v690 = vmul.f32 %v671, %v679
      %v691 = vmul.f32 %v672, %v679
      %v692 = vmul.f32 %v673, %v679
      %v693 = vmul.f32 %v674, %v679
      %v694 = vmul.f32 %v675, %v679
      %v695 = vmul.f32 %v676, %v679
      %v696 = vmul.f32 %v677, %v679
      %v698 = vperm.slane %v223, 0
      %v700 = vadd.f32 %v681, %v698
      %v701 = vadd.f32 %v682, %v698
      %v702 = vadd.f32 %v683, %v698
      %v703 = vadd.f32 %v684, %v698
      %v704 = vadd.f32 %v685, %v698
      %v705 = vadd.f32 %v686, %v698
      %v706 = vadd.f32 %v687, %v698
      %v707 = vadd.f32 %v688, %v698
      %v708 = vadd.f32 %v689, %v698
      %v709 = vadd.f32 %v690, %v698
      %v710 = vadd.f32 %v691, %v698
      %v711 = vadd.f32 %v692, %v698
      %v712 = vadd.f32 %v693, %v698
      %v713 = vadd.f32 %v694, %v698
      %v714 = vadd.f32 %v695, %v698
      %v715 = vadd.f32 %v696, %v698
      %v716 = vmax.f32 %v700, 0.0
      %v717 = vmax.f32 %v701, 0.0
      %v718 = vmax.f32 %v702, 0.0
      %v719 = vmax.f32 %v703, 0.0
      %v720 = vmax.f32 %v704, 0.0
      %v721 = vmax.f32 %v705, 0.0
      %v722 = vmax.f32 %v706, 0.0
      %v723 = vmax.f32 %v707, 0.0
      %v724 = vmax.f32 %v708, 0.0
      %v725 = vmax.f32 %v709, 0.0
      %v726 = vmax.f32 %v710, 0.0
      %v727 = vmax.f32 %v711, 0.0
      %v728 = vmax.f32 %v712, 0.0
      %v729 = vmax.f32 %v713, 0.0
      %v730 = vmax.f32 %v714, 0.0
      %v731 = vmax.f32 %v715, 0.0
      %vm732 = vcmask 64512
      %733 = vst.msk [vmem:[%s219] sm:$0xff] %vm732, %v716
      %734 = vst.msk [vmem:[%s219 + $0x8] sm:$0xff] %vm732, %v717
      %735 = vst.msk [vmem:[%s219 + $0x10] sm:$0xff] %vm732, %v718
      %736 = vst.msk [vmem:[%s219 + $0x18] sm:$0xff] %vm732, %v719
      %737 = vst.msk [vmem:[%s219 + $0x20] sm:$0xff] %vm732, %v720
      %738 = vst.msk [vmem:[%s219 + $0x28] sm:$0xff] %vm732, %v721
      %739 = vst.msk [vmem:[%s219 + $0x30] sm:$0xff] %vm732, %v722
      %740 = vst.msk [vmem:[%s219 + $0x38] sm:$0xff] %vm732, %v723
      %741 = vst.msk [vmem:[%s219 + $0x40] sm:$0xff] %vm732, %v724
      %742 = vst.msk [vmem:[%s219 + $0x48] sm:$0xff] %vm732, %v725
      %743 = vst.msk [vmem:[%s219 + $0x50] sm:$0xff] %vm732, %v726
      %744 = vst.msk [vmem:[%s219 + $0x58] sm:$0xff] %vm732, %v727
      %745 = vst.msk [vmem:[%s219 + $0x60] sm:$0xff] %vm732, %v728
      %746 = vst.msk [vmem:[%s219 + $0x68] sm:$0xff] %vm732, %v729
      %747 = vst.msk [vmem:[%s219 + $0x70] sm:$0xff] %vm732, %v730
      %748 = vst.msk [vmem:[%s219 + $0x78] sm:$0xff] %vm732, %v731
      %s749 = smul.u32 16, %s20
      %p750 = scmp.lt.s32.totalorder %s19, 1
      %s751 = scalar_select %p750, %s19, 1
      %p752 = scmp.lt.s32.totalorder %s749, 31
      %s753 = scalar_select %p752, %s749, 31
      %s754 = smul.addr %s751, 32
      %s755 = sadd.s32 %s753, %s754
      %s756 = smul.addr %s755, 8
      %s757 = scalar_lea.vmem %s4, %s756
      // Predicated region
      $region37: #{conv_block_forward.3} parent=35 // pred_check
        %p758 = pneg %p136
      $region38: #{conv_block_forward.3} parent=35 // pred_check_branch
        %760 = sbr.rel (%p758) target = $region40
      $region39: #{conv_block_forward.3} parent=35 // pred_region
        %s761 = smul.u32 16, %s20
      $region40: #{conv_block_forward.3} parent=35 // pred_fallthru
        _
    $region36: #{conv_block_forward.3} parent=5 // pred_fallthru
      _
    %p762 = scmp.le.s32.totalorder 2, %s10
    // Predicated region
    $region41: #{conv_block_forward.3} parent=5 // pred_check
      %p763 = pneg %p762
    $region42: #{conv_block_forward.3} parent=5 // pred_check_branch
      %765 = sbr.rel (%p763) target = $region44
    $region43: #{conv_block_forward.3} parent=5 // pred_region
      %s766 = ssub.s32 %s10, 2
      // Predicated region
      $region45: #{conv_block_forward.3} parent=43 // pred_check
        %p767 = pneg %p142
      $region46: #{conv_block_forward.3} parent=43 // pred_check_branch
        %769 = sbr.rel (%p767) target = $region48
      $region47: #{conv_block_forward.3} parent=43 // pred_region
        %s770 = smul.u32 16, %s22
        %p771 = scmp.lt.s32.totalorder %s21, 1
        %s772 = scalar_select %p771, %s21, 1
        %p773 = scmp.lt.s32.totalorder %s770, 31
        %s774 = scalar_select %p773, %s770, 31
        %s775 = smul.addr %s772, 32
        %s776 = sadd.s32 %s774, %s775
        %s777 = smul.addr %s776, 8
        %s778 = scalar_lea.vmem %s4, %s777
      $region48: #{conv_block_forward.3} parent=43 // pred_fallthru
        _
    $region44: #{conv_block_forward.3} parent=5 // pred_fallthru
      _
  $region6: #{conv_block_forward.3} parent=0 // loop_footer
    %s14 = sadd.s32 1, %s10
  $region7: #{conv_block_forward.3} parent=0 // loop_footer_branch
    %9 = sbr.rel target = $region3
  $region8: #{conv_block_forward.3} parent=0 // loop_exit
    _

</llo_original>
